<compile_context>
chip_gen: v5e
topology: v5e:2x2
jax: 0.10.0
libtpu: 0.0.40
codegen_flags: <defaults>
</compile_context>

<pallas_src>
import math
import functools
import numpy as np

import jax
import jax.numpy as jnp
from jax.experimental import pallas as pl
from jax.experimental.pallas import tpu as pltpu

# ----------------------------- config (small demo sizes) -----------------------------
HIDDEN = 32          # config.hidden_size
HEADS = 2            # config.num_attention_heads
HEAD = HIDDEN // HEADS
INTER = 64           # config.intermediate_size
LAYERS = 2           # config.num_hidden_layers
BUCKET = 8           # config.position_bucket_size
NBUCKETS = 2 * BUCKET - 1
MAXPOS = 32          # config.max_position_embeddings
EPS = 1e-7           # config.layer_norm_eps
SEQ = 8
BATCH = 2
SCALE = 1.0 / math.sqrt(3 * HEAD)

# Matmul-operand dtype. f32 keeps exact forward semantics of the f32 PyTorch module;
# set to jnp.bfloat16 on v6e/v7x for MXU throughput (accumulation stays f32 via
# preferred_element_type; LayerNorm / softmax / GeGLU statistics stay f32 regardless).
MATMUL_DTYPE = jnp.float32


# ----------------------------- relative position buckets (host-side, ints) -----------
def make_log_bucket_position(relative_pos, bucket_size, max_position):
    sign = np.sign(relative_pos)
    mid = bucket_size // 2
    abs_pos = np.where((relative_pos < mid) & (relative_pos > -mid),
                       mid - 1, np.abs(relative_pos)).astype(np.float64)
    log_pos = np.ceil(np.log(abs_pos / mid) / math.log((max_position - 1) / mid)
                      * (mid - 1)).astype(np.int64) + mid
    bucket_pos = np.where(abs_pos <= mid, relative_pos, log_pos * sign).astype(np.int64)
    return bucket_pos


def _offset_bucket_ids(seq):
    """Bucket row of the relative-embedding table for offsets -(S-1) .. (S-1)."""
    offsets = np.arange(-(seq - 1), seq, dtype=np.int64)
    return np.asarray(BUCKET - 1 + make_log_bucket_position(offsets, BUCKET, MAXPOS),
                      dtype=np.int32)


# ----------------------------- helpers --------------------------------------------------
def _row_tile(M):
    # Toy-size tile so the grid/pipelining path is exercised; at production sizes use
    # 256-512 rows (v5e/v6e) / ~256 rows (v7x, 64 MiB VMEM + 2 TCs).
    return 8 if M % 8 == 0 else M


def _ln_noaffine(x, eps):
    mu = jnp.mean(x, axis=-1, keepdims=True)
    xc = x - mu
    var = jnp.mean(xc * xc, axis=-1, keepdims=True)
    return xc * jax.lax.rsqrt(var + eps)


def _ln_affine_xla(x, gamma, beta, eps):
    return _ln_noaffine(x, eps) * gamma[None, :] + beta[None, :]


def _skew(x, s):
    """x: (s, 2s-1)  ->  y: (s, s) with y[i, j] = x[i, j + (s-1-i)].

    Static per-row slices (robust at toy S). At production S replace with a single
    strided XLU rotate: pltpu.roll(x, s, axis=1, stride=1, stride_axis=0)[:, :s].
    """
    rows = [x[i:i + 1, s - 1 - i: 2 * s - 1 - i] for i in range(s)]
    return jnp.concatenate(rows, axis=0)


# ----------------------------- fused kernels -----------------------------------------
def _ln_qkv_kernel(x_ref, w_ref, b_ref, o_ref, *, eps):
    """pre_layer_norm (no affine) + fused QKV projection."""
    x = x_ref[...].astype(jnp.float32)
    xn = _ln_noaffine(x, eps)
    acc = jnp.dot(xn.astype(MATMUL_DTYPE), w_ref[...].astype(MATMUL_DTYPE),
                  preferred_element_type=jnp.float32)
    o_ref[...] = (acc + b_ref[...]).astype(o_ref.dtype)


def ln_qkv(x2d, w, b, eps=EPS):
    M, K = x2d.shape
    N = w.shape[1]
    tm = _row_tile(M)
    return pl.pallas_call(
        functools.partial(_ln_qkv_kernel, eps=eps),
        out_shape=jax.ShapeDtypeStruct((M, N), jnp.float32),
        grid=(M // tm,),
        in_specs=[pl.BlockSpec((tm, K), lambda i: (i, 0)),
                  pl.BlockSpec((K, N), lambda i: (0, 0)),
                  pl.BlockSpec((1, N), lambda i: (0, 0))],
        out_specs=pl.BlockSpec((tm, N), lambda i: (i, 0)),
        compiler_params=pltpu.CompilerParams(dimension_semantics=("parallel",)),
    )(x2d, w, b.reshape(1, N))


def _attention_kernel(qkv_ref, qpos_ref, kpos_ref, mask_ref, o_ref,
                      *, nh, hd, seq, hidden, scale):
    """One batch element per program; heads unrolled with static slices.

    qkv_ref : (S, 3H) rows of this batch element, columns [q | k | v], heads packed D-wide
    qpos_ref: (2S-1, H) query-position table, forward offset order, pre-scaled by SCALE
    kpos_ref: (2S-1, H) key-position table, reversed offset order
    mask_ref: (1, 1, S) float, 1.0 => masked (padded) key
    o_ref   : (S, H) context, heads packed along the hidden (lane) axis
    """
    masked = mask_ref[0] > 0.5                         # (1, S) -> broadcasts over query rows
    qkv = qkv_ref[...].astype(jnp.float32)             # (S, 3H)
    qpos = qpos_ref[...].astype(jnp.float32)           # (2S-1, H)
    kpos = kpos_ref[...].astype(jnp.float32)           # (2S-1, H)

    for h in range(nh):                                # static unroll; all slices static
        lo, hi = h * hd, (h + 1) * hd
        q = qkv[:, lo:hi]                              # (S, D)
        k = qkv[:, hidden + lo: hidden + hi]           # (S, D)
        v = qkv[:, 2 * hidden + lo: 2 * hidden + hi]   # (S, D)
        qph = qpos[:, lo:hi]                           # (2S-1, D)
        kph = kpos[:, lo:hi]                           # (2S-1, D)

        qs = q * scale                                 # scale folded into q once

        # content-content scores (MXU)
        scores = jnp.dot(qs.astype(MATMUL_DTYPE), k.astype(MATMUL_DTYPE).T,
                         preferred_element_type=jnp.float32)           # (S, S)
        # content->position / position->content: small MXU matmuls against the
        # offset-ordered (2S-1, D) tables, then the relative-shift (skew) to (S, S).
        c2p = jnp.dot(qs.astype(MATMUL_DTYPE), kph.astype(MATMUL_DTYPE).T,
                      preferred_element_type=jnp.float32)               # (S, 2S-1)
        p2c = jnp.dot(k.astype(MATMUL_DTYPE), qph.astype(MATMUL_DTYPE).T,
                      preferred_element_type=jnp.float32)               # (S, 2S-1)
        scores = scores + _skew(c2p, seq) + _skew(p2c, seq).T

        # MaskedSoftmax: fill masked keys with -inf, softmax, zero masked probs
        scores = jnp.where(masked, -1e30, scores)
        m = jnp.max(scores, axis=-1, keepdims=True)
        e = jnp.exp(scores - m)
        p = e / jnp.sum(e, axis=-1, keepdims=True)     # exact division (matches torch)
        p = jnp.where(masked, 0.0, p)

        ctx = jnp.dot(p.astype(MATMUL_DTYPE), v.astype(MATMUL_DTYPE),
                      preferred_element_type=jnp.float32)               # (S, D)
        o_ref[:, lo:hi] = ctx.astype(o_ref.dtype)      # lane-dense (S, H) slab output


def attention_core(qkv_slab, qpos_fwd, kpos_rev, mask_f, *, batch, seq):
    H = HIDDEN
    return pl.pallas_call(
        functools.partial(_attention_kernel, nh=HEADS, hd=HEAD, seq=seq,
                          hidden=H, scale=SCALE),
        out_shape=jax.ShapeDtypeStruct((batch * seq, H), jnp.float32),
        grid=(batch,),
        in_specs=[
            pl.BlockSpec((seq, 3 * H), lambda b: (b, 0)),          # per-batch QKV rows
            pl.BlockSpec((2 * seq - 1, H), lambda b: (0, 0)),      # resident across batch
            pl.BlockSpec((2 * seq - 1, H), lambda b: (0, 0)),      # resident across batch
            pl.BlockSpec((1, 1, seq), lambda b: (b, 0, 0)),        # per-key padding mask
        ],
        out_specs=pl.BlockSpec((seq, H), lambda b: (b, 0)),
        compiler_params=pltpu.CompilerParams(dimension_semantics=("parallel",)),
    )(qkv_slab, qpos_fwd, kpos_rev, mask_f)


def _outproj_ln_res_kernel(ctx_ref, res_ref, w_ref, b_ref, g_ref, beta_ref, o_ref, *, eps):
    """out_proj + post_layer_norm (affine) + residual add, fused."""
    ctx = ctx_ref[...].astype(jnp.float32)
    y = jnp.dot(ctx.astype(MATMUL_DTYPE), w_ref[...].astype(MATMUL_DTYPE),
                preferred_element_type=jnp.float32) + b_ref[...]
    yn = _ln_noaffine(y, eps)
    o_ref[...] = (res_ref[...].astype(jnp.float32)
                  + yn * g_ref[...] + beta_ref[...]).astype(o_ref.dtype)


def outproj_ln_res(ctx2d, res2d, w, b, gamma, beta, eps=EPS):
    M, K = ctx2d.shape
    N = w.shape[1]
    tm = _row_tile(M)
    return pl.pallas_call(
        functools.partial(_outproj_ln_res_kernel, eps=eps),
        out_shape=jax.ShapeDtypeStruct((M, N), jnp.float32),
        grid=(M // tm,),
        in_specs=[pl.BlockSpec((tm, K), lambda i: (i, 0)),
                  pl.BlockSpec((tm, N), lambda i: (i, 0)),
                  pl.BlockSpec((K, N), lambda i: (0, 0)),
                  pl.BlockSpec((1, N), lambda i: (0, 0)),
                  pl.BlockSpec((1, N), lambda i: (0, 0)),
                  pl.BlockSpec((1, N), lambda i: (0, 0))],
        out_specs=pl.BlockSpec((tm, N), lambda i: (i, 0)),
        compiler_params=pltpu.CompilerParams(dimension_semantics=("parallel",)),
    )(ctx2d, res2d, w, b.reshape(1, N), gamma.reshape(1, N), beta.reshape(1, N))


def _mlp_res_kernel(x_ref, w1_ref, w2_ref, o_ref, *, eps):
    """FeedForward fused: LN -> W1 -> GeGLU(tanh) -> LN -> W2, plus residual add."""
    x = x_ref[...].astype(jnp.float32)
    xn = _ln_noaffine(x, eps)
    h = jnp.dot(xn.astype(MATMUL_DTYPE), w1_ref[...].astype(MATMUL_DTYPE),
                preferred_element_type=jnp.float32)               # (tm, 2*INTER)
    half = h.shape[-1] // 2
    val, gate = h[:, :half], h[:, half:]
    c = 0.7978845608028654  # sqrt(2/pi)
    gel = 0.5 * gate * (1.0 + jnp.tanh(c * (gate + 0.044715 * gate * gate * gate)))
    g = val * gel
    gn = _ln_noaffine(g, eps)
    y = jnp.dot(gn.astype(MATMUL_DTYPE), w2_ref[...].astype(MATMUL_DTYPE),
                preferred_element_type=jnp.float32)
    o_ref[...] = (x + y).astype(o_ref.dtype)


def mlp_res(x2d, w1, w2, eps=EPS):
    M, H = x2d.shape
    I2 = w1.shape[1]
    tm = _row_tile(M)
    return pl.pallas_call(
        functools.partial(_mlp_res_kernel, eps=eps),
        out_shape=jax.ShapeDtypeStruct((M, H), jnp.float32),
        grid=(M // tm,),
        in_specs=[pl.BlockSpec((tm, H), lambda i: (i, 0)),
                  pl.BlockSpec((H, I2), lambda i: (0, 0)),
                  pl.BlockSpec((I2 // 2, H), lambda i: (0, 0))],
        out_specs=pl.BlockSpec((tm, H), lambda i: (i, 0)),
        compiler_params=pltpu.CompilerParams(dimension_semantics=("parallel",)),
    )(x2d, w1, w2)


# ----------------------------- model glue ---------------------------------------------
def encoder_forward(params, hidden_states, attention_mask):
    S, B, H = hidden_states.shape
    mask_f = attention_mask.reshape(B, 1, S).astype(jnp.float32)   # 1.0 => masked key

    # offset -> bucket-row maps (trace-time constants)
    ids = _offset_bucket_ids(S)
    fwd_ids = jnp.asarray(ids)                  # row c  <->  offset c-(S-1)
    rev_ids = jnp.asarray(ids[::-1].copy())     # row c  <->  offset (S-1)-c

    # shared relative-embedding LayerNorm: hoisted out of the layer loop (tiny, XLA)
    rel_ln = _ln_affine_xla(params['rel_emb'], params['rel_ln_g'], params['rel_ln_b'], EPS)

    # (batch, seq) row-ordered activation slab; layout transposes only at the boundary
    x = hidden_states.transpose(1, 0, 2).reshape(B * S, H)

    states = [hidden_states]
    for lp in params['layers']:
        # per-layer position tables: (NB,H)x(H,2H) projection + offset gather, plain XLA
        postab = jnp.dot(rel_ln, lp['wpos']) + lp['bpos'][None, :]          # (NB, 2H)
        qpos_fwd = jnp.take(postab[:, :H], fwd_ids, axis=0)                 # (2S-1, H), *SCALE folded
        kpos_rev = jnp.take(postab[:, H:], rev_ids, axis=0)                 # (2S-1, H)

        qkv = ln_qkv(x, lp['wqkv'], lp['bqkv'])                             # (B*S, 3H)
        ctx = attention_core(qkv, qpos_fwd, kpos_rev, mask_f, batch=B, seq=S)
        x = outproj_ln_res(ctx, x, lp['wo'], lp['bo'],
                           lp['post_ln_g'], lp['post_ln_b'])                # x + attn(x)
        x = mlp_res(x, lp['w1'], lp['w2'])                                  # x + mlp(x)
        states.append(x.reshape(B, S, H).transpose(1, 0, 2))                # (S, B, H) copy
    return states


# ----------------------------- deterministic parameter init --------------------------
def trunc_normal(key, shape, std):
    return (std * jax.random.truncated_normal(key, -2.0, 2.0, shape)).astype(jnp.float32)


def init_params(key):
    std = math.sqrt(2.0 / (5.0 * HIDDEN))
    k_rel, *k_layers = jax.random.split(key, 1 + LAYERS)
    params = {
        'rel_emb': trunc_normal(k_rel, (NBUCKETS, HIDDEN), std),
        'rel_ln_g': jnp.ones((HIDDEN,), jnp.float32),
        'rel_ln_b': jnp.zeros((HIDDEN,), jnp.float32),
        'layers': [],
    }
    zeros_h = jnp.zeros((HIDDEN,), jnp.float32)
    for i in range(LAYERS):
        lk = jax.random.split(k_layers[i], 6)
        mlp_scale = math.sqrt(1.0 / (2.0 * (1 + i)))   # Encoder.__init__ rescaling
        wq = trunc_normal(lk[0], (HIDDEN, HIDDEN), std)
        wk = trunc_normal(lk[1], (HIDDEN, HIDDEN), std)
        wv = trunc_normal(lk[2], (HIDDEN, HIDDEN), std)
        wo = trunc_normal(lk[3], (HIDDEN, HIDDEN), std)
        lp = dict(
            wqkv=jnp.concatenate([wq, wk, wv], axis=1),                 # (H, 3H)
            bqkv=jnp.concatenate([zeros_h, zeros_h, zeros_h]),          # (3H,)
            wpos=jnp.concatenate([wq * SCALE, wk], axis=1),             # (H, 2H), p2c scale folded
            bpos=jnp.concatenate([zeros_h * SCALE, zeros_h]),           # (2H,)
            wo=wo,
            bo=zeros_h,
            post_ln_g=jnp.ones((HIDDEN,), jnp.float32),
            post_ln_b=zeros_h,
            w1=trunc_normal(lk[4], (HIDDEN, 2 * INTER), std) * mlp_scale,
            w2=trunc_normal(lk[5], (INTER, HIDDEN), std) * mlp_scale,
        )
        params['layers'].append(lp)
    return params


# ----------------------------- main ---------------------------------------------------
if __name__ == "__main__":
    root = jax.random.PRNGKey(0)
    k_params, k_input = jax.random.split(root)

    params = init_params(k_params)
    hidden_states = jax.random.normal(k_input, (SEQ, BATCH, HIDDEN), jnp.float32)

    # padding mask: True = padded position (batch 1 has 2 padded tokens)
    lengths = jnp.array([SEQ, SEQ - 2])
    attention_mask = (jnp.arange(SEQ)[None, :] >= lengths[:, None]).reshape(BATCH, 1, 1, SEQ)

    fwd = jax.jit(encoder_forward)
    outs = fwd(params, hidden_states, attention_mask)
    jax.block_until_ready(outs[-1])

    assert len(outs) == LAYERS + 1
    assert outs[-1].shape == (SEQ, BATCH, HIDDEN)
    assert bool(jnp.all(jnp.isfinite(outs[-1])))
    print("KERNEL_OK")
</pallas_src>

<mosaic_0001>
module attributes {stable_mosaic.version = 11 : i64} {
  func.func @_ln_qkv_kernel(%arg0: i32, %arg1: memref<8x32xf32, #tpu.memory_space<vmem>>, %arg2: memref<32x96xf32, #tpu.memory_space<vmem>>, %arg3: memref<1x96xf32, #tpu.memory_space<vmem>>, %arg4: memref<8x96xf32, #tpu.memory_space<vmem>>) attributes {dimension_semantics = [#tpu.dimension_semantics<parallel>], iteration_bounds = array<i64: 2>, scalar_prefetch = 0 : i64, scratch_operands = 0 : i64, tpu.core_type = #tpu.core_type<tc>, window_params = [{transform_indices = @transform_0, window_bounds = array<i64: 8, 32>}, {pipeline_mode = #tpu.pipeline_mode<synchronous>, transform_indices = @transform_1, window_bounds = array<i64: 32, 96>}, {pipeline_mode = #tpu.pipeline_mode<synchronous>, transform_indices = @transform_2, window_bounds = array<i64: 1, 96>}, {transform_indices = @transform_3, window_bounds = array<i64: 8, 96>}]} {
    %c0 = arith.constant 0 : index
    %c0_0 = arith.constant 0 : index
    %0 = vector.load %arg1[%c0, %c0_0] : memref<8x32xf32, #tpu.memory_space<vmem>>, vector<8x32xf32>
    %cst = arith.constant dense<0.000000e+00> : vector<8xf32>
    %1 = vector.multi_reduction <add>, %0, %cst [1] : vector<8x32xf32> to vector<8xf32>
    %2 = vector.shape_cast %1 : vector<8xf32> to vector<8x1xf32>
    %cst_1 = arith.constant 3.200000e+01 : f32
    %3 = vector.broadcast %cst_1 : f32 to vector<8x1xf32>
    %4 = arith.divf %2, %3 : vector<8x1xf32>
    %5 = vector.broadcast %4 : vector<8x1xf32> to vector<8x32xf32>
    %6 = arith.subf %0, %5 : vector<8x32xf32>
    %7 = arith.mulf %6, %6 : vector<8x32xf32>
    %cst_2 = arith.constant dense<0.000000e+00> : vector<8xf32>
    %8 = vector.multi_reduction <add>, %7, %cst_2 [1] : vector<8x32xf32> to vector<8xf32>
    %9 = vector.shape_cast %8 : vector<8xf32> to vector<8x1xf32>
    %cst_3 = arith.constant 3.200000e+01 : f32
    %10 = vector.broadcast %cst_3 : f32 to vector<8x1xf32>
    %11 = arith.divf %9, %10 : vector<8x1xf32>
    %cst_4 = arith.constant 1.000000e-07 : f32
    %12 = vector.broadcast %cst_4 : f32 to vector<8x1xf32>
    %13 = arith.addf %11, %12 : vector<8x1xf32>
    %14 = math.rsqrt %13 : vector<8x1xf32>
    %15 = vector.broadcast %14 : vector<8x1xf32> to vector<8x32xf32>
    %16 = arith.mulf %6, %15 : vector<8x32xf32>
    %c0_5 = arith.constant 0 : index
    %c0_6 = arith.constant 0 : index
    %17 = vector.load %arg2[%c0_5, %c0_6] : memref<32x96xf32, #tpu.memory_space<vmem>>, vector<32x96xf32>
    %cst_7 = arith.constant dense<0.000000e+00> : vector<8x96xf32>
    %18 = tpu.matmul %16, %17, %cst_7 {dimension_numbers = #tpu.dot_dimension_numbers<[1], [0], [0], [1], [0, 0, 1, 1], [], []>} : vector<8x32xf32>, vector<32x96xf32>, vector<8x96xf32> -> vector<8x96xf32>
    %c0_8 = arith.constant 0 : index
    %c0_9 = arith.constant 0 : index
    %19 = vector.load %arg3[%c0_8, %c0_9] : memref<1x96xf32, #tpu.memory_space<vmem>>, vector<1x96xf32>
    %20 = vector.broadcast %19 : vector<1x96xf32> to vector<8x96xf32>
    %21 = arith.addf %18, %20 : vector<8x96xf32>
    %c0_10 = arith.constant 0 : index
    %c0_11 = arith.constant 0 : index
    %22 = vector.load %arg4[%c0_10, %c0_11] : memref<8x96xf32, #tpu.memory_space<vmem>>, vector<8x96xf32>
    tpu.vector_store %arg4[%c0_10, %c0_11], %21 {strides = array<i32>} : memref<8x96xf32, #tpu.memory_space<vmem>>, vector<8x96xf32>,
    return
  }
  func.func @transform_0(%arg0: i32) -> (i32, i32) {
    %c0_i32 = arith.constant 0 : i32
    %c0_i32_0 = arith.constant 0 : i32
    return %arg0, %c0_i32 : i32, i32
  }
  func.func @transform_1(%arg0: i32) -> (i32, i32) {
    %c0_i32 = arith.constant 0 : i32
    %c0_i32_0 = arith.constant 0 : i32
    %c0_i32_1 = arith.constant 0 : i32
    return %c0_i32, %c0_i32_0 : i32, i32
  }
  func.func @transform_2(%arg0: i32) -> (i32, i32) {
    %c0_i32 = arith.constant 0 : i32
    %c0_i32_0 = arith.constant 0 : i32
    %c0_i32_1 = arith.constant 0 : i32
    return %c0_i32, %c0_i32_0 : i32, i32
  }
  func.func @transform_3(%arg0: i32) -> (i32, i32) {
    %c0_i32 = arith.constant 0 : i32
    %c0_i32_0 = arith.constant 0 : i32
    return %arg0, %c0_i32 : i32, i32
  }
}

module attributes {stable_mosaic.version = 11 : i64} {
  func.func @_outproj_ln_res_kernel(%arg0: i32, %arg1: memref<8x32xf32, #tpu.memory_space<vmem>>, %arg2: memref<8x32xf32, #tpu.memory_space<vmem>>, %arg3: memref<32x32xf32, #tpu.memory_space<vmem>>, %arg4: memref<1x32xf32, #tpu.memory_space<vmem>>, %arg5: memref<1x32xf32, #tpu.memory_space<vmem>>, %arg6: memref<1x32xf32, #tpu.memory_space<vmem>>, %arg7: memref<8x32xf32, #tpu.memory_space<vmem>>) attributes {dimension_semantics = [#tpu.dimension_semantics<parallel>], iteration_bounds = array<i64: 2>, scalar_prefetch = 0 : i64, scratch_operands = 0 : i64, tpu.core_type = #tpu.core_type<tc>, window_params = [{transform_indices = @transform_0, window_bounds = array<i64: 8, 32>}, {transform_indices = @transform_1, window_bounds = array<i64: 8, 32>}, {pipeline_mode = #tpu.pipeline_mode<synchronous>, transform_indices = @transform_2, window_bounds = array<i64: 32, 32>}, {pipeline_mode = #tpu.pipeline_mode<synchronous>, transform_indices = @transform_3, window_bounds = array<i64: 1, 32>}, {pipeline_mode = #tpu.pipeline_mode<synchronous>, transform_indices = @transform_4, window_bounds = array<i64: 1, 32>}, {pipeline_mode = #tpu.pipeline_mode<synchronous>, transform_indices = @transform_5, window_bounds = array<i64: 1, 32>}, {transform_indices = @transform_6, window_bounds = array<i64: 8, 32>}]} {
    %c0 = arith.constant 0 : index
    %c0_0 = arith.constant 0 : index
    %0 = vector.load %arg1[%c0, %c0_0] : memref<8x32xf32, #tpu.memory_space<vmem>>, vector<8x32xf32>
    %c0_1 = arith.constant 0 : index
    %c0_2 = arith.constant 0 : index
    %1 = vector.load %arg3[%c0_1, %c0_2] : memref<32x32xf32, #tpu.memory_space<vmem>>, vector<32x32xf32>
    %cst = arith.constant dense<0.000000e+00> : vector<8x32xf32>
    %2 = tpu.matmul %0, %1, %cst {dimension_numbers = #tpu.dot_dimension_numbers<[1], [0], [0], [1], [0, 0, 1, 1], [], []>} : vector<8x32xf32>, vector<32x32xf32>, vector<8x32xf32> -> vector<8x32xf32>
    %c0_3 = arith.constant 0 : index
    %c0_4 = arith.constant 0 : index
    %3 = vector.load %arg4[%c0_3, %c0_4] : memref<1x32xf32, #tpu.memory_space<vmem>>, vector<1x32xf32>
    %4 = vector.broadcast %3 : vector<1x32xf32> to vector<8x32xf32>
    %5 = arith.addf %2, %4 : vector<8x32xf32>
    %cst_5 = arith.constant dense<0.000000e+00> : vector<8xf32>
    %6 = vector.multi_reduction <add>, %5, %cst_5 [1] : vector<8x32xf32> to vector<8xf32>
    %7 = vector.shape_cast %6 : vector<8xf32> to vector<8x1xf32>
    %cst_6 = arith.constant 3.200000e+01 : f32
    %8 = vector.broadcast %cst_6 : f32 to vector<8x1xf32>
    %9 = arith.divf %7, %8 : vector<8x1xf32>
    %10 = vector.broadcast %9 : vector<8x1xf32> to vector<8x32xf32>
    %11 = arith.subf %5, %10 : vector<8x32xf32>
    %12 = arith.mulf %11, %11 : vector<8x32xf32>
    %cst_7 = arith.constant dense<0.000000e+00> : vector<8xf32>
    %13 = vector.multi_reduction <add>, %12, %cst_7 [1] : vector<8x32xf32> to vector<8xf32>
    %14 = vector.shape_cast %13 : vector<8xf32> to vector<8x1xf32>
    %cst_8 = arith.constant 3.200000e+01 : f32
    %15 = vector.broadcast %cst_8 : f32 to vector<8x1xf32>
    %16 = arith.divf %14, %15 : vector<8x1xf32>
    %cst_9 = arith.constant 1.000000e-07 : f32
    %17 = vector.broadcast %cst_9 : f32 to vector<8x1xf32>
    %18 = arith.addf %16, %17 : vector<8x1xf32>
    %19 = math.rsqrt %18 : vector<8x1xf32>
    %20 = vector.broadcast %19 : vector<8x1xf32> to vector<8x32xf32>
    %21 = arith.mulf %11, %20 : vector<8x32xf32>
    %c0_10 = arith.constant 0 : index
    %c0_11 = arith.constant 0 : index
    %22 = vector.load %arg2[%c0_10, %c0_11] : memref<8x32xf32, #tpu.memory_space<vmem>>, vector<8x32xf32>
    %c0_12 = arith.constant 0 : index
    %c0_13 = arith.constant 0 : index
    %23 = vector.load %arg5[%c0_12, %c0_13] : memref<1x32xf32, #tpu.memory_space<vmem>>, vector<1x32xf32>
    %24 = vector.broadcast %23 : vector<1x32xf32> to vector<8x32xf32>
    %25 = arith.mulf %21, %24 : vector<8x32xf32>
    %26 = arith.addf %22, %25 : vector<8x32xf32>
    %c0_14 = arith.constant 0 : index
    %c0_15 = arith.constant 0 : index
    %27 = vector.load %arg6[%c0_14, %c0_15] : memref<1x32xf32, #tpu.memory_space<vmem>>, vector<1x32xf32>
    %28 = vector.broadcast %27 : vector<1x32xf32> to vector<8x32xf32>
    %29 = arith.addf %26, %28 : vector<8x32xf32>
    %c0_16 = arith.constant 0 : index
    %c0_17 = arith.constant 0 : index
    %30 = vector.load %arg7[%c0_16, %c0_17] : memref<8x32xf32, #tpu.memory_space<vmem>>, vector<8x32xf32>
    tpu.vector_store %arg7[%c0_16, %c0_17], %29 {strides = array<i32>} : memref<8x32xf32, #tpu.memory_space<vmem>>, vector<8x32xf32>,
    return
  }
  func.func @transform_0(%arg0: i32) -> (i32, i32) {
    %c0_i32 = arith.constant 0 : i32
    %c0_i32_0 = arith.constant 0 : i32
    return %arg0, %c0_i32 : i32, i32
  }
  func.func @transform_1(%arg0: i32) -> (i32, i32) {
    %c0_i32 = arith.constant 0 : i32
    %c0_i32_0 = arith.constant 0 : i32
    return %arg0, %c0_i32 : i32, i32
  }
  func.func @transform_2(%arg0: i32) -> (i32, i32) {
    %c0_i32 = arith.constant 0 : i32
    %c0_i32_0 = arith.constant 0 : i32
    %c0_i32_1 = arith.constant 0 : i32
    return %c0_i32, %c0_i32_0 : i32, i32
  }
  func.func @transform_3(%arg0: i32) -> (i32, i32) {
    %c0_i32 = arith.constant 0 : i32
    %c0_i32_0 = arith.constant 0 : i32
    %c0_i32_1 = arith.constant 0 : i32
    return %c0_i32, %c0_i32_0 : i32, i32
  }
  func.func @transform_4(%arg0: i32) -> (i32, i32) {
    %c0_i32 = arith.constant 0 : i32
    %c0_i32_0 = arith.constant 0 : i32
    %c0_i32_1 = arith.constant 0 : i32
    return %c0_i32, %c0_i32_0 : i32, i32
  }
  func.func @transform_5(%arg0: i32) -> (i32, i32) {
    %c0_i32 = arith.constant 0 : i32
    %c0_i32_0 = arith.constant 0 : i32
    %c0_i32_1 = arith.constant 0 : i32
    return %c0_i32, %c0_i32_0 : i32, i32
  }
  func.func @transform_6(%arg0: i32) -> (i32, i32) {
    %c0_i32 = arith.constant 0 : i32
    %c0_i32_0 = arith.constant 0 : i32
    return %arg0, %c0_i32 : i32, i32
  }
}

module attributes {stable_mosaic.version = 11 : i64} {
  func.func @_attention_kernel(%arg0: i32, %arg1: memref<8x96xf32, #tpu.memory_space<vmem>>, %arg2: memref<15x32xf32, #tpu.memory_space<vmem>>, %arg3: memref<15x32xf32, #tpu.memory_space<vmem>>, %arg4: memref<1x1x8xf32, #tpu.memory_space<vmem>>, %arg5: memref<8x32xf32, #tpu.memory_space<vmem>>) attributes {dimension_semantics = [#tpu.dimension_semantics<parallel>], iteration_bounds = array<i64: 2>, scalar_prefetch = 0 : i64, scratch_operands = 0 : i64, tpu.core_type = #tpu.core_type<tc>, window_params = [{transform_indices = @transform_0, window_bounds = array<i64: 8, 96>}, {pipeline_mode = #tpu.pipeline_mode<synchronous>, transform_indices = @transform_1, window_bounds = array<i64: 15, 32>}, {pipeline_mode = #tpu.pipeline_mode<synchronous>, transform_indices = @transform_2, window_bounds = array<i64: 15, 32>}, {transform_indices = @transform_3, window_bounds = array<i64: 1, 1, 8>}, {transform_indices = @transform_4, window_bounds = array<i64: 8, 32>}]} {
    %c0 = arith.constant 0 : index
    %c0_0 = arith.constant 0 : index
    %c0_1 = arith.constant 0 : index
    %0 = vector.load %arg4[%c0, %c0_0, %c0_1] : memref<1x1x8xf32, #tpu.memory_space<vmem>>, vector<1x1x8xf32>
    %1 = vector.shape_cast %0 : vector<1x1x8xf32> to vector<1x8xf32>
    %cst = arith.constant 5.000000e-01 : f32
    %2 = vector.broadcast %cst : f32 to vector<1x8xf32>
    %3 = arith.cmpf ogt, %1, %2 : vector<1x8xf32>
    %c0_2 = arith.constant 0 : index
    %c0_3 = arith.constant 0 : index
    %4 = vector.load %arg1[%c0_2, %c0_3] : memref<8x96xf32, #tpu.memory_space<vmem>>, vector<8x96xf32>
    %c0_4 = arith.constant 0 : index
    %c0_5 = arith.constant 0 : index
    %5 = vector.load %arg2[%c0_4, %c0_5] : memref<15x32xf32, #tpu.memory_space<vmem>>, vector<15x32xf32>
    %c0_6 = arith.constant 0 : index
    %c0_7 = arith.constant 0 : index
    %6 = vector.load %arg3[%c0_6, %c0_7] : memref<15x32xf32, #tpu.memory_space<vmem>>, vector<15x32xf32>
    %7 = vector.extract_strided_slice %4 {offsets = [0, 0], sizes = [8, 16], strides = [1, 1]} : vector<8x96xf32> to vector<8x16xf32>
    %8 = vector.extract_strided_slice %4 {offsets = [0, 32], sizes = [8, 16], strides = [1, 1]} : vector<8x96xf32> to vector<8x16xf32>
    %9 = vector.extract_strided_slice %4 {offsets = [0, 64], sizes = [8, 16], strides = [1, 1]} : vector<8x96xf32> to vector<8x16xf32>
    %10 = vector.extract_strided_slice %5 {offsets = [0, 0], sizes = [15, 16], strides = [1, 1]} : vector<15x32xf32> to vector<15x16xf32>
    %11 = vector.extract_strided_slice %6 {offsets = [0, 0], sizes = [15, 16], strides = [1, 1]} : vector<15x32xf32> to vector<15x16xf32>
    %cst_8 = arith.constant 0.144337565 : f32
    %12 = vector.broadcast %cst_8 : f32 to vector<8x16xf32>
    %13 = arith.mulf %7, %12 : vector<8x16xf32>
    %14 = tpu.transpose %8, [1, 0] : vector<8x16xf32> -> vector<16x8xf32>
    %cst_9 = arith.constant dense<0.000000e+00> : vector<8x8xf32>
    %15 = tpu.matmul %13, %14, %cst_9 {dimension_numbers = #tpu.dot_dimension_numbers<[1], [0], [0], [1], [0, 0, 1, 1], [], []>} : vector<8x16xf32>, vector<16x8xf32>, vector<8x8xf32> -> vector<8x8xf32>
    %16 = tpu.transpose %11, [1, 0] : vector<15x16xf32> -> vector<16x15xf32>
    %cst_10 = arith.constant dense<0.000000e+00> : vector<8x15xf32>
    %17 = tpu.matmul %13, %16, %cst_10 {dimension_numbers = #tpu.dot_dimension_numbers<[1], [0], [0], [1], [0, 0, 1, 1], [], []>} : vector<8x16xf32>, vector<16x15xf32>, vector<8x15xf32> -> vector<8x15xf32>
    %18 = tpu.transpose %10, [1, 0] : vector<15x16xf32> -> vector<16x15xf32>
    %cst_11 = arith.constant dense<0.000000e+00> : vector<8x15xf32>
    %19 = tpu.matmul %8, %18, %cst_11 {dimension_numbers = #tpu.dot_dimension_numbers<[1], [0], [0], [1], [0, 0, 1, 1], [], []>} : vector<8x16xf32>, vector<16x15xf32>, vector<8x15xf32> -> vector<8x15xf32>
    %20 = vector.extract_strided_slice %17 {offsets = [0, 7], sizes = [1, 8], strides = [1, 1]} : vector<8x15xf32> to vector<1x8xf32>
    %21 = vector.extract_strided_slice %17 {offsets = [1, 6], sizes = [1, 8], strides = [1, 1]} : vector<8x15xf32> to vector<1x8xf32>
    %22 = vector.extract_strided_slice %17 {offsets = [2, 5], sizes = [1, 8], strides = [1, 1]} : vector<8x15xf32> to vector<1x8xf32>
    %23 = vector.extract_strided_slice %17 {offsets = [3, 4], sizes = [1, 8], strides = [1, 1]} : vector<8x15xf32> to vector<1x8xf32>
    %24 = vector.extract_strided_slice %17 {offsets = [4, 3], sizes = [1, 8], strides = [1, 1]} : vector<8x15xf32> to vector<1x8xf32>
    %25 = vector.extract_strided_slice %17 {offsets = [5, 2], sizes = [1, 8], strides = [1, 1]} : vector<8x15xf32> to vector<1x8xf32>
    %26 = vector.extract_strided_slice %17 {offsets = [6, 1], sizes = [1, 8], strides = [1, 1]} : vector<8x15xf32> to vector<1x8xf32>
    %27 = vector.extract_strided_slice %17 {offsets = [7, 0], sizes = [1, 8], strides = [1, 1]} : vector<8x15xf32> to vector<1x8xf32>
    %28 = tpu.concatenate %20, %21, %22, %23, %24, %25, %26, %27 in 0 : vector<1x8xf32>, vector<1x8xf32>, vector<1x8xf32>, vector<1x8xf32>, vector<1x8xf32>, vector<1x8xf32>, vector<1x8xf32>, vector<1x8xf32> -> vector<8x8xf32>
    %29 = arith.addf %15, %28 : vector<8x8xf32>
    %30 = vector.extract_strided_slice %19 {offsets = [0, 7], sizes = [1, 8], strides = [1, 1]} : vector<8x15xf32> to vector<1x8xf32>
    %31 = vector.extract_strided_slice %19 {offsets = [1, 6], sizes = [1, 8], strides = [1, 1]} : vector<8x15xf32> to vector<1x8xf32>
    %32 = vector.extract_strided_slice %19 {offsets = [2, 5], sizes = [1, 8], strides = [1, 1]} : vector<8x15xf32> to vector<1x8xf32>
    %33 = vector.extract_strided_slice %19 {offsets = [3, 4], sizes = [1, 8], strides = [1, 1]} : vector<8x15xf32> to vector<1x8xf32>
    %34 = vector.extract_strided_slice %19 {offsets = [4, 3], sizes = [1, 8], strides = [1, 1]} : vector<8x15xf32> to vector<1x8xf32>
    %35 = vector.extract_strided_slice %19 {offsets = [5, 2], sizes = [1, 8], strides = [1, 1]} : vector<8x15xf32> to vector<1x8xf32>
    %36 = vector.extract_strided_slice %19 {offsets = [6, 1], sizes = [1, 8], strides = [1, 1]} : vector<8x15xf32> to vector<1x8xf32>
    %37 = vector.extract_strided_slice %19 {offsets = [7, 0], sizes = [1, 8], strides = [1, 1]} : vector<8x15xf32> to vector<1x8xf32>
    %38 = tpu.concatenate %30, %31, %32, %33, %34, %35, %36, %37 in 0 : vector<1x8xf32>, vector<1x8xf32>, vector<1x8xf32>, vector<1x8xf32>, vector<1x8xf32>, vector<1x8xf32>, vector<1x8xf32>, vector<1x8xf32> -> vector<8x8xf32>
    %39 = tpu.transpose %38, [1, 0] : vector<8x8xf32> -> vector<8x8xf32>
    %40 = arith.addf %29, %39 : vector<8x8xf32>
    %cst_12 = arith.constant -1.000000e+30 : f32
    %41 = vector.shape_cast %3 : vector<1x8xi1> to vector<1x8xi1>
    %42 = vector.broadcast %41 : vector<1x8xi1> to vector<8x8xi1>
    %43 = vector.broadcast %cst_12 : f32 to vector<8x8xf32>
    %44 = arith.select %42, %43, %40 : vector<8x8xi1>, vector<8x8xf32>
    %cst_13 = arith.constant dense<0xFF800000> : vector<8xf32>
    %45 = vector.multi_reduction <maximumf>, %44, %cst_13 [1] : vector<8x8xf32> to vector<8xf32>
    %46 = vector.shape_cast %45 : vector<8xf32> to vector<8x1xf32>
    %47 = vector.broadcast %46 : vector<8x1xf32> to vector<8x8xf32>
    %48 = arith.subf %44, %47 : vector<8x8xf32>
    %49 = math.exp %48 : vector<8x8xf32>
    %cst_14 = arith.constant dense<0.000000e+00> : vector<8xf32>
    %50 = vector.multi_reduction <add>, %49, %cst_14 [1] : vector<8x8xf32> to vector<8xf32>
    %51 = vector.shape_cast %50 : vector<8xf32> to vector<8x1xf32>
    %52 = vector.broadcast %51 : vector<8x1xf32> to vector<8x8xf32>
    %53 = arith.divf %49, %52 : vector<8x8xf32>
    %cst_15 = arith.constant 0.000000e+00 : f32
    %54 = vector.shape_cast %3 : vector<1x8xi1> to vector<1x8xi1>
    %55 = vector.broadcast %54 : vector<1x8xi1> to vector<8x8xi1>
    %56 = vector.broadcast %cst_15 : f32 to vector<8x8xf32>
    %57 = arith.select %55, %56, %53 : vector<8x8xi1>, vector<8x8xf32>
    %cst_16 = arith.constant dense<0.000000e+00> : vector<8x16xf32>
    %58 = tpu.matmul %57, %9, %cst_16 {dimension_numbers = #tpu.dot_dimension_numbers<[1], [0], [0], [1], [0, 0, 1, 1], [], []>} : vector<8x8xf32>, vector<8x16xf32>, vector<8x16xf32> -> vector<8x16xf32>
    %c0_17 = arith.constant 0 : index
    %c0_18 = arith.constant 0 : index
    %59 = vector.load %arg5[%c0_17, %c0_18] : memref<8x32xf32, #tpu.memory_space<vmem>>, vector<8x16xf32>
    tpu.vector_store %arg5[%c0_17, %c0_18], %58 {strides = array<i32>} : memref<8x32xf32, #tpu.memory_space<vmem>>, vector<8x16xf32>,
    %60 = vector.extract_strided_slice %4 {offsets = [0, 16], sizes = [8, 16], strides = [1, 1]} : vector<8x96xf32> to vector<8x16xf32>
    %61 = vector.extract_strided_slice %4 {offsets = [0, 48], sizes = [8, 16], strides = [1, 1]} : vector<8x96xf32> to vector<8x16xf32>
    %62 = vector.extract_strided_slice %4 {offsets = [0, 80], sizes = [8, 16], strides = [1, 1]} : vector<8x96xf32> to vector<8x16xf32>
    %63 = vector.extract_strided_slice %5 {offsets = [0, 16], sizes = [15, 16], strides = [1, 1]} : vector<15x32xf32> to vector<15x16xf32>
    %64 = vector.extract_strided_slice %6 {offsets = [0, 16], sizes = [15, 16], strides = [1, 1]} : vector<15x32xf32> to vector<15x16xf32>
    %cst_19 = arith.constant 0.144337565 : f32
    %65 = vector.broadcast %cst_19 : f32 to vector<8x16xf32>
    %66 = arith.mulf %60, %65 : vector<8x16xf32>
    %67 = tpu.transpose %61, [1, 0] : vector<8x16xf32> -> vector<16x8xf32>
    %cst_20 = arith.constant dense<0.000000e+00> : vector<8x8xf32>
    %68 = tpu.matmul %66, %67, %cst_20 {dimension_numbers = #tpu.dot_dimension_numbers<[1], [0], [0], [1], [0, 0, 1, 1], [], []>} : vector<8x16xf32>, vector<16x8xf32>, vector<8x8xf32> -> vector<8x8xf32>
    %69 = tpu.transpose %64, [1, 0] : vector<15x16xf32> -> vector<16x15xf32>
    %cst_21 = arith.constant dense<0.000000e+00> : vector<8x15xf32>
    %70 = tpu.matmul %66, %69, %cst_21 {dimension_numbers = #tpu.dot_dimension_numbers<[1], [0], [0], [1], [0, 0, 1, 1], [], []>} : vector<8x16xf32>, vector<16x15xf32>, vector<8x15xf32> -> vector<8x15xf32>
    %71 = tpu.transpose %63, [1, 0] : vector<15x16xf32> -> vector<16x15xf32>
    %cst_22 = arith.constant dense<0.000000e+00> : vector<8x15xf32>
    %72 = tpu.matmul %61, %71, %cst_22 {dimension_numbers = #tpu.dot_dimension_numbers<[1], [0], [0], [1], [0, 0, 1, 1], [], []>} : vector<8x16xf32>, vector<16x15xf32>, vector<8x15xf32> -> vector<8x15xf32>
    %73 = vector.extract_strided_slice %70 {offsets = [0, 7], sizes = [1, 8], strides = [1, 1]} : vector<8x15xf32> to vector<1x8xf32>
    %74 = vector.extract_strided_slice %70 {offsets = [1, 6], sizes = [1, 8], strides = [1, 1]} : vector<8x15xf32> to vector<1x8xf32>
    %75 = vector.extract_strided_slice %70 {offsets = [2, 5], sizes = [1, 8], strides = [1, 1]} : vector<8x15xf32> to vector<1x8xf32>
    %76 = vector.extract_strided_slice %70 {offsets = [3, 4], sizes = [1, 8], strides = [1, 1]} : vector<8x15xf32> to vector<1x8xf32>
    %77 = vector.extract_strided_slice %70 {offsets = [4, 3], sizes = [1, 8], strides = [1, 1]} : vector<8x15xf32> to vector<1x8xf32>
    %78 = vector.extract_strided_slice %70 {offsets = [5, 2], sizes = [1, 8], strides = [1, 1]} : vector<8x15xf32> to vector<1x8xf32>
    %79 = vector.extract_strided_slice %70 {offsets = [6, 1], sizes = [1, 8], strides = [1, 1]} : vector<8x15xf32> to vector<1x8xf32>
    %80 = vector.extract_strided_slice %70 {offsets = [7, 0], sizes = [1, 8], strides = [1, 1]} : vector<8x15xf32> to vector<1x8xf32>
    %81 = tpu.concatenate %73, %74, %75, %76, %77, %78, %79, %80 in 0 : vector<1x8xf32>, vector<1x8xf32>, vector<1x8xf32>, vector<1x8xf32>, vector<1x8xf32>, vector<1x8xf32>, vector<1x8xf32>, vector<1x8xf32> -> vector<8x8xf32>
    %82 = arith.addf %68, %81 : vector<8x8xf32>
    %83 = vector.extract_strided_slice %72 {offsets = [0, 7], sizes = [1, 8], strides = [1, 1]} : vector<8x15xf32> to vector<1x8xf32>
    %84 = vector.extract_strided_slice %72 {offsets = [1, 6], sizes = [1, 8], strides = [1, 1]} : vector<8x15xf32> to vector<1x8xf32>
    %85 = vector.extract_strided_slice %72 {offsets = [2, 5], sizes = [1, 8], strides = [1, 1]} : vector<8x15xf32> to vector<1x8xf32>
    %86 = vector.extract_strided_slice %72 {offsets = [3, 4], sizes = [1, 8], strides = [1, 1]} : vector<8x15xf32> to vector<1x8xf32>
    %87 = vector.extract_strided_slice %72 {offsets = [4, 3], sizes = [1, 8], strides = [1, 1]} : vector<8x15xf32> to vector<1x8xf32>
    %88 = vector.extract_strided_slice %72 {offsets = [5, 2], sizes = [1, 8], strides = [1, 1]} : vector<8x15xf32> to vector<1x8xf32>
    %89 = vector.extract_strided_slice %72 {offsets = [6, 1], sizes = [1, 8], strides = [1, 1]} : vector<8x15xf32> to vector<1x8xf32>
    %90 = vector.extract_strided_slice %72 {offsets = [7, 0], sizes = [1, 8], strides = [1, 1]} : vector<8x15xf32> to vector<1x8xf32>
    %91 = tpu.concatenate %83, %84, %85, %86, %87, %88, %89, %90 in 0 : vector<1x8xf32>, vector<1x8xf32>, vector<1x8xf32>, vector<1x8xf32>, vector<1x8xf32>, vector<1x8xf32>, vector<1x8xf32>, vector<1x8xf32> -> vector<8x8xf32>
    %92 = tpu.transpose %91, [1, 0] : vector<8x8xf32> -> vector<8x8xf32>
    %93 = arith.addf %82, %92 : vector<8x8xf32>
    %cst_23 = arith.constant -1.000000e+30 : f32
    %94 = vector.shape_cast %3 : vector<1x8xi1> to vector<1x8xi1>
    %95 = vector.broadcast %94 : vector<1x8xi1> to vector<8x8xi1>
    %96 = vector.broadcast %cst_23 : f32 to vector<8x8xf32>
    %97 = arith.select %95, %96, %93 : vector<8x8xi1>, vector<8x8xf32>
    %cst_24 = arith.constant dense<0xFF800000> : vector<8xf32>
    %98 = vector.multi_reduction <maximumf>, %97, %cst_24 [1] : vector<8x8xf32> to vector<8xf32>
    %99 = vector.shape_cast %98 : vector<8xf32> to vector<8x1xf32>
    %100 = vector.broadcast %99 : vector<8x1xf32> to vector<8x8xf32>
    %101 = arith.subf %97, %100 : vector<8x8xf32>
    %102 = math.exp %101 : vector<8x8xf32>
    %cst_25 = arith.constant dense<0.000000e+00> : vector<8xf32>
    %103 = vector.multi_reduction <add>, %102, %cst_25 [1] : vector<8x8xf32> to vector<8xf32>
    %104 = vector.shape_cast %103 : vector<8xf32> to vector<8x1xf32>
    %105 = vector.broadcast %104 : vector<8x1xf32> to vector<8x8xf32>
    %106 = arith.divf %102, %105 : vector<8x8xf32>
    %cst_26 = arith.constant 0.000000e+00 : f32
    %107 = vector.shape_cast %3 : vector<1x8xi1> to vector<1x8xi1>
    %108 = vector.broadcast %107 : vector<1x8xi1> to vector<8x8xi1>
    %109 = vector.broadcast %cst_26 : f32 to vector<8x8xf32>
    %110 = arith.select %108, %109, %106 : vector<8x8xi1>, vector<8x8xf32>
    %cst_27 = arith.constant dense<0.000000e+00> : vector<8x16xf32>
    %111 = tpu.matmul %110, %62, %cst_27 {dimension_numbers = #tpu.dot_dimension_numbers<[1], [0], [0], [1], [0, 0, 1, 1], [], []>} : vector<8x8xf32>, vector<8x16xf32>, vector<8x16xf32> -> vector<8x16xf32>
    %c0_28 = arith.constant 0 : index
    %c16 = arith.constant 16 : index
    %112 = vector.load %arg5[%c0_28, %c16] : memref<8x32xf32, #tpu.memory_space<vmem>>, vector<8x16xf32>
    tpu.vector_store %arg5[%c0_28, %c16], %111 {strides = array<i32>} : memref<8x32xf32, #tpu.memory_space<vmem>>, vector<8x16xf32>,
    return
  }
  func.func @transform_0(%arg0: i32) -> (i32, i32) {
    %c0_i32 = arith.constant 0 : i32
    %c0_i32_0 = arith.constant 0 : i32
    return %arg0, %c0_i32 : i32, i32
  }
  func.func @transform_1(%arg0: i32) -> (i32, i32) {
    %c0_i32 = arith.constant 0 : i32
    %c0_i32_0 = arith.constant 0 : i32
    %c0_i32_1 = arith.constant 0 : i32
    return %c0_i32, %c0_i32_0 : i32, i32
  }
  func.func @transform_2(%arg0: i32) -> (i32, i32) {
    %c0_i32 = arith.constant 0 : i32
    %c0_i32_0 = arith.constant 0 : i32
    %c0_i32_1 = arith.constant 0 : i32
    return %c0_i32, %c0_i32_0 : i32, i32
  }
  func.func @transform_3(%arg0: i32) -> (i32, i32, i32) {
    %c0_i32 = arith.constant 0 : i32
    %c0_i32_0 = arith.constant 0 : i32
    %c0_i32_1 = arith.constant 0 : i32
    return %arg0, %c0_i32, %c0_i32_0 : i32, i32, i32
  }
  func.func @transform_4(%arg0: i32) -> (i32, i32) {
    %c0_i32 = arith.constant 0 : i32
    %c0_i32_0 = arith.constant 0 : i32
    return %arg0, %c0_i32 : i32, i32
  }
}

module attributes {stable_mosaic.version = 11 : i64} {
  func.func @_mlp_res_kernel(%arg0: i32, %arg1: memref<8x32xf32, #tpu.memory_space<vmem>>, %arg2: memref<32x128xf32, #tpu.memory_space<vmem>>, %arg3: memref<64x32xf32, #tpu.memory_space<vmem>>, %arg4: memref<8x32xf32, #tpu.memory_space<vmem>>) attributes {dimension_semantics = [#tpu.dimension_semantics<parallel>], iteration_bounds = array<i64: 2>, scalar_prefetch = 0 : i64, scratch_operands = 0 : i64, tpu.core_type = #tpu.core_type<tc>, window_params = [{transform_indices = @transform_0, window_bounds = array<i64: 8, 32>}, {pipeline_mode = #tpu.pipeline_mode<synchronous>, transform_indices = @transform_1, window_bounds = array<i64: 32, 128>}, {pipeline_mode = #tpu.pipeline_mode<synchronous>, transform_indices = @transform_2, window_bounds = array<i64: 64, 32>}, {transform_indices = @transform_3, window_bounds = array<i64: 8, 32>}]} {
    %c0 = arith.constant 0 : index
    %c0_0 = arith.constant 0 : index
    %0 = vector.load %arg1[%c0, %c0_0] : memref<8x32xf32, #tpu.memory_space<vmem>>, vector<8x32xf32>
    %cst = arith.constant dense<0.000000e+00> : vector<8xf32>
    %1 = vector.multi_reduction <add>, %0, %cst [1] : vector<8x32xf32> to vector<8xf32>
    %2 = vector.shape_cast %1 : vector<8xf32> to vector<8x1xf32>
    %cst_1 = arith.constant 3.200000e+01 : f32
    %3 = vector.broadcast %cst_1 : f32 to vector<8x1xf32>
    %4 = arith.divf %2, %3 : vector<8x1xf32>
    %5 = vector.broadcast %4 : vector<8x1xf32> to vector<8x32xf32>
    %6 = arith.subf %0, %5 : vector<8x32xf32>
    %7 = arith.mulf %6, %6 : vector<8x32xf32>
    %cst_2 = arith.constant dense<0.000000e+00> : vector<8xf32>
    %8 = vector.multi_reduction <add>, %7, %cst_2 [1] : vector<8x32xf32> to vector<8xf32>
    %9 = vector.shape_cast %8 : vector<8xf32> to vector<8x1xf32>
    %cst_3 = arith.constant 3.200000e+01 : f32
    %10 = vector.broadcast %cst_3 : f32 to vector<8x1xf32>
    %11 = arith.divf %9, %10 : vector<8x1xf32>
    %cst_4 = arith.constant 1.000000e-07 : f32
    %12 = vector.broadcast %cst_4 : f32 to vector<8x1xf32>
    %13 = arith.addf %11, %12 : vector<8x1xf32>
    %14 = math.rsqrt %13 : vector<8x1xf32>
    %15 = vector.broadcast %14 : vector<8x1xf32> to vector<8x32xf32>
    %16 = arith.mulf %6, %15 : vector<8x32xf32>
    %c0_5 = arith.constant 0 : index
    %c0_6 = arith.constant 0 : index
    %17 = vector.load %arg2[%c0_5, %c0_6] : memref<32x128xf32, #tpu.memory_space<vmem>>, vector<32x128xf32>
    %cst_7 = arith.constant dense<0.000000e+00> : vector<8x128xf32>
    %18 = tpu.matmul %16, %17, %cst_7 {dimension_numbers = #tpu.dot_dimension_numbers<[1], [0], [0], [1], [0, 0, 1, 1], [], []>} : vector<8x32xf32>, vector<32x128xf32>, vector<8x128xf32> -> vector<8x128xf32>
    %19 = vector.extract_strided_slice %18 {offsets = [0, 0], sizes = [8, 64], strides = [1, 1]} : vector<8x128xf32> to vector<8x64xf32>
    %20 = vector.extract_strided_slice %18 {offsets = [0, 64], sizes = [8, 64], strides = [1, 1]} : vector<8x128xf32> to vector<8x64xf32>
    %cst_8 = arith.constant 5.000000e-01 : f32
    %21 = vector.broadcast %cst_8 : f32 to vector<8x64xf32>
    %22 = arith.mulf %21, %20 : vector<8x64xf32>
    %cst_9 = arith.constant 4.471500e-02 : f32
    %23 = vector.broadcast %cst_9 : f32 to vector<8x64xf32>
    %24 = arith.mulf %23, %20 : vector<8x64xf32>
    %25 = arith.mulf %24, %20 : vector<8x64xf32>
    %26 = arith.mulf %25, %20 : vector<8x64xf32>
    %27 = arith.addf %20, %26 : vector<8x64xf32>
    %cst_10 = arith.constant 0.797884583 : f32
    %28 = vector.broadcast %cst_10 : f32 to vector<8x64xf32>
    %29 = arith.mulf %28, %27 : vector<8x64xf32>
    %30 = math.tanh %29 : vector<8x64xf32>
    %cst_11 = arith.constant 1.000000e+00 : f32
    %31 = vector.broadcast %cst_11 : f32 to vector<8x64xf32>
    %32 = arith.addf %31, %30 : vector<8x64xf32>
    %33 = arith.mulf %22, %32 : vector<8x64xf32>
    %34 = arith.mulf %19, %33 : vector<8x64xf32>
    %cst_12 = arith.constant dense<0.000000e+00> : vector<8xf32>
    %35 = vector.multi_reduction <add>, %34, %cst_12 [1] : vector<8x64xf32> to vector<8xf32>
    %36 = vector.shape_cast %35 : vector<8xf32> to vector<8x1xf32>
    %cst_13 = arith.constant 6.400000e+01 : f32
    %37 = vector.broadcast %cst_13 : f32 to vector<8x1xf32>
    %38 = arith.divf %36, %37 : vector<8x1xf32>
    %39 = vector.broadcast %38 : vector<8x1xf32> to vector<8x64xf32>
    %40 = arith.subf %34, %39 : vector<8x64xf32>
    %41 = arith.mulf %40, %40 : vector<8x64xf32>
    %cst_14 = arith.constant dense<0.000000e+00> : vector<8xf32>
    %42 = vector.multi_reduction <add>, %41, %cst_14 [1] : vector<8x64xf32> to vector<8xf32>
    %43 = vector.shape_cast %42 : vector<8xf32> to vector<8x1xf32>
    %cst_15 = arith.constant 6.400000e+01 : f32
    %44 = vector.broadcast %cst_15 : f32 to vector<8x1xf32>
    %45 = arith.divf %43, %44 : vector<8x1xf32>
    %cst_16 = arith.constant 1.000000e-07 : f32
    %46 = vector.broadcast %cst_16 : f32 to vector<8x1xf32>
    %47 = arith.addf %45, %46 : vector<8x1xf32>
    %48 = math.rsqrt %47 : vector<8x1xf32>
    %49 = vector.broadcast %48 : vector<8x1xf32> to vector<8x64xf32>
    %50 = arith.mulf %40, %49 : vector<8x64xf32>
    %c0_17 = arith.constant 0 : index
    %c0_18 = arith.constant 0 : index
    %51 = vector.load %arg3[%c0_17, %c0_18] : memref<64x32xf32, #tpu.memory_space<vmem>>, vector<64x32xf32>
    %cst_19 = arith.constant dense<0.000000e+00> : vector<8x32xf32>
    %52 = tpu.matmul %50, %51, %cst_19 {dimension_numbers = #tpu.dot_dimension_numbers<[1], [0], [0], [1], [0, 0, 1, 1], [], []>} : vector<8x64xf32>, vector<64x32xf32>, vector<8x32xf32> -> vector<8x32xf32>
    %53 = arith.addf %0, %52 : vector<8x32xf32>
    %c0_20 = arith.constant 0 : index
    %c0_21 = arith.constant 0 : index
    %54 = vector.load %arg4[%c0_20, %c0_21] : memref<8x32xf32, #tpu.memory_space<vmem>>, vector<8x32xf32>
    tpu.vector_store %arg4[%c0_20, %c0_21], %53 {strides = array<i32>} : memref<8x32xf32, #tpu.memory_space<vmem>>, vector<8x32xf32>,
    return
  }
  func.func @transform_0(%arg0: i32) -> (i32, i32) {
    %c0_i32 = arith.constant 0 : i32
    %c0_i32_0 = arith.constant 0 : i32
    return %arg0, %c0_i32 : i32, i32
  }
  func.func @transform_1(%arg0: i32) -> (i32, i32) {
    %c0_i32 = arith.constant 0 : i32
    %c0_i32_0 = arith.constant 0 : i32
    %c0_i32_1 = arith.constant 0 : i32
    return %c0_i32, %c0_i32_0 : i32, i32
  }
  func.func @transform_2(%arg0: i32) -> (i32, i32) {
    %c0_i32 = arith.constant 0 : i32
    %c0_i32_0 = arith.constant 0 : i32
    %c0_i32_1 = arith.constant 0 : i32
    return %c0_i32, %c0_i32_0 : i32, i32
  }
  func.func @transform_3(%arg0: i32) -> (i32, i32) {
    %c0_i32 = arith.constant 0 : i32
    %c0_i32_0 = arith.constant 0 : i32
    return %arg0, %c0_i32 : i32, i32
  }
}

</mosaic_0001>

<llo_original>
// kernel: encoder_forward.10
$region0: #{encoder_forward.10}
  #allocation0 [shape = 'u32[]', space=smem, size = 0x4, offset = 0x4, fixed_abs, tag = 'smem constant byte address 0x4 - core index']
  #allocation1 [shape = 'u32[72,128]{1,0:T(1,128)}', space=vmem, size = 0x9000, scoped, tag = 'internal scratch']
  %s0 = inlined_call_operand.vmem [shape: f32[16,32], index: 0, kind: input, shape index: {}]
  %s1 = inlined_call_operand.vmem [shape: f32[16,32], index: 1, kind: input, shape index: {}]
  %s2 = inlined_call_operand.vmem [shape: f32[32,32], index: 2, kind: input, shape index: {}]
  %s3 = inlined_call_operand.vmem [shape: f32[1,32], index: 3, kind: input, shape index: {}]
  %s4 = inlined_call_operand.vmem [shape: f32[1,32], index: 4, kind: input, shape index: {}]
  %s5 = inlined_call_operand.vmem [shape: f32[1,32], index: 5, kind: input, shape index: {}]
  %s6 = inlined_call_operand.vmem [shape: f32[16,32], index: 6, kind: output, shape index: {}]
  %s7 = sld [smem:[#allocation0]]
  $region57: #{encoder_forward.10} parent=0
    _
  %s9 = ssub.s32 1, %s7
  %s10 = scalar_select 0, %s9, %s7
  loop: start=0, step=1, limit=4
  $region2: #{encoder_forward.10} parent=0 // loop_pre_header
    _
  $region3: #{encoder_forward.10} parent=0 // loop_header
    %s12 = sphi 0, %s16
    %p13 = scmp.ge.s32.totalorder %s12, 4
    %s22 = sphi 0, %s24
    %s25 = sphi 0, %s22
    %s26 = sphi 0, %s25
    %s42 = sphi 0, %s26
    %s48 = sphi 0, %s50
    %s51 = sphi 0, %s48
    %s52 = sphi 0, %s51
    %s68 = sphi 0, %s52
    %s72 = sphi 0, %s72
    %s74 = sphi 0, %s72
    %s75 = sphi 0, %s74
    %s89 = sphi 0, %s75
    %s93 = sphi 0, %s93
    %s95 = sphi 0, %s93
    %s96 = sphi 0, %s95
    %s110 = sphi 0, %s96
    %s114 = sphi 0, %s114
    %s116 = sphi 0, %s114
    %s117 = sphi 0, %s116
    %s131 = sphi 0, %s117
    %s135 = sphi 0, %s135
    %s137 = sphi 0, %s135
    %s138 = sphi 0, %s137
    %s152 = sphi 0, %s138
    %s158 = sphi 0, %s160
    %s161 = sphi 0, %s158
    %s162 = sphi 0, %s161
    %s178 = sphi 0, %s162
  $region4: #{encoder_forward.10} parent=0 // loop_header_branch
    %15 = sbr.rel (%p13) target = $region8
  $region5: #{encoder_forward.10} parent=0 // loop_body
    %s17 = ssub.s32 %s12, 1
    %s18 = ssub.s32 %s12, 2
    %s19 = sadd.s32 %s12, 1
    %s20 = ssub.s32 %s12, %s19
    %p21 = scmp.eq.s32.totalorder %s20, 0
    %s23 = sadd.s32 %s22, 1
    %s24 = scalar_select %p21, %s22, %s23
    %p27 = pneg %p21
    %p28 = scmp.eq.s32.totalorder %s12, 1
    %p29 = por %p27, %p28
    %p30 = scmp.ne.s32.totalorder %s22, %s25
    %p31 = scmp.eq.s32.totalorder %s12, 0
    %p32 = por %p30, %p31
    %p33 = scmp.ne.s32.totalorder %s22, %s25
    %p34 = scmp.eq.s32.totalorder %s17, 1
    %p35 = por %p33, %p34
    %p36 = scmp.ne.s32.totalorder %s25, %s26
    %p37 = scmp.eq.s32.totalorder %s17, 0
    %p38 = por %p36, %p37
    %p39 = scmp.ne.s32.totalorder %s25, %s26
    %p40 = scmp.eq.s32.totalorder %s18, 1
    %p41 = por %p39, %p40
    %p43 = scmp.ne.s32.totalorder %s26, %s42
    %p44 = scmp.eq.s32.totalorder %s18, 0
    %p45 = por %p43, %p44
    %s46 = ssub.s32 %s12, %s19
    %p47 = scmp.eq.s32.totalorder %s46, 0
    %s49 = sadd.s32 %s48, 1
    %s50 = scalar_select %p47, %s48, %s49
    %p53 = pneg %p47
    %p54 = scmp.eq.s32.totalorder %s12, 1
    %p55 = por %p53, %p54
    %p56 = scmp.ne.s32.totalorder %s48, %s51
    %p57 = scmp.eq.s32.totalorder %s12, 0
    %p58 = por %p56, %p57
    %p59 = scmp.ne.s32.totalorder %s48, %s51
    %p60 = scmp.eq.s32.totalorder %s17, 1
    %p61 = por %p59, %p60
    %p62 = scmp.ne.s32.totalorder %s51, %s52
    %p63 = scmp.eq.s32.totalorder %s17, 0
    %p64 = por %p62, %p63
    %p65 = scmp.ne.s32.totalorder %s51, %s52
    %p66 = scmp.eq.s32.totalorder %s18, 1
    %p67 = por %p65, %p66
    %p69 = scmp.ne.s32.totalorder %s52, %s68
    %p70 = scmp.eq.s32.totalorder %s18, 0
    %p71 = por %p69, %p70
    %s73 = sadd.s32 %s72, 1
    %p76 = scmp.eq.s32.totalorder %s12, 1
    %p77 = scmp.ne.s32.totalorder %s72, %s74
    %p78 = scmp.eq.s32.totalorder %s12, 0
    %p79 = por %p77, %p78
    %p80 = scmp.ne.s32.totalorder %s72, %s74
    %p81 = scmp.eq.s32.totalorder %s17, 1
    %p82 = por %p80, %p81
    %p83 = scmp.ne.s32.totalorder %s74, %s75
    %p84 = scmp.eq.s32.totalorder %s17, 0
    %p85 = por %p83, %p84
    %p86 = scmp.ne.s32.totalorder %s74, %s75
    %p87 = scmp.eq.s32.totalorder %s18, 1
    %p88 = por %p86, %p87
    %p90 = scmp.ne.s32.totalorder %s75, %s89
    %p91 = scmp.eq.s32.totalorder %s18, 0
    %p92 = por %p90, %p91
    %s94 = sadd.s32 %s93, 1
    %p97 = scmp.eq.s32.totalorder %s12, 1
    %p98 = scmp.ne.s32.totalorder %s93, %s95
    %p99 = scmp.eq.s32.totalorder %s12, 0
    %p100 = por %p98, %p99
    %p101 = scmp.ne.s32.totalorder %s93, %s95
    %p102 = scmp.eq.s32.totalorder %s17, 1
    %p103 = por %p101, %p102
    %p104 = scmp.ne.s32.totalorder %s95, %s96
    %p105 = scmp.eq.s32.totalorder %s17, 0
    %p106 = por %p104, %p105
    %p107 = scmp.ne.s32.totalorder %s95, %s96
    %p108 = scmp.eq.s32.totalorder %s18, 1
    %p109 = por %p107, %p108
    %p111 = scmp.ne.s32.totalorder %s96, %s110
    %p112 = scmp.eq.s32.totalorder %s18, 0
    %p113 = por %p111, %p112
    %s115 = sadd.s32 %s114, 1
    %p118 = scmp.eq.s32.totalorder %s12, 1
    %p119 = scmp.ne.s32.totalorder %s114, %s116
    %p120 = scmp.eq.s32.totalorder %s12, 0
    %p121 = por %p119, %p120
    %p122 = scmp.ne.s32.totalorder %s114, %s116
    %p123 = scmp.eq.s32.totalorder %s17, 1
    %p124 = por %p122, %p123
    %p125 = scmp.ne.s32.totalorder %s116, %s117
    %p126 = scmp.eq.s32.totalorder %s17, 0
    %p127 = por %p125, %p126
    %p128 = scmp.ne.s32.totalorder %s116, %s117
    %p129 = scmp.eq.s32.totalorder %s18, 1
    %p130 = por %p128, %p129
    %p132 = scmp.ne.s32.totalorder %s117, %s131
    %p133 = scmp.eq.s32.totalorder %s18, 0
    %p134 = por %p132, %p133
    %s136 = sadd.s32 %s135, 1
    %p139 = scmp.eq.s32.totalorder %s12, 1
    %p140 = scmp.ne.s32.totalorder %s135, %s137
    %p141 = scmp.eq.s32.totalorder %s12, 0
    %p142 = por %p140, %p141
    %p143 = scmp.ne.s32.totalorder %s135, %s137
    %p144 = scmp.eq.s32.totalorder %s17, 1
    %p145 = por %p143, %p144
    %p146 = scmp.ne.s32.totalorder %s137, %s138
    %p147 = scmp.eq.s32.totalorder %s17, 0
    %p148 = por %p146, %p147
    %p149 = scmp.ne.s32.totalorder %s137, %s138
    %p150 = scmp.eq.s32.totalorder %s18, 1
    %p151 = por %p149, %p150
    %p153 = scmp.ne.s32.totalorder %s138, %s152
    %p154 = scmp.eq.s32.totalorder %s18, 0
    %p155 = por %p153, %p154
    %s156 = ssub.s32 %s12, %s19
    %p157 = scmp.eq.s32.totalorder %s156, 0
    %s159 = sadd.s32 %s158, 1
    %s160 = scalar_select %p157, %s158, %s159
    %p163 = pneg %p157
    %p164 = scmp.eq.s32.totalorder %s12, 1
    %p165 = por %p163, %p164
    %p166 = scmp.ne.s32.totalorder %s158, %s161
    %p167 = scmp.eq.s32.totalorder %s12, 0
    %p168 = por %p166, %p167
    %p169 = scmp.ne.s32.totalorder %s158, %s161
    %p170 = scmp.eq.s32.totalorder %s17, 1
    %p171 = por %p169, %p170
    %p172 = scmp.ne.s32.totalorder %s161, %s162
    %p173 = scmp.eq.s32.totalorder %s17, 0
    %p174 = por %p172, %p173
    %p175 = scmp.ne.s32.totalorder %s161, %s162
    %p176 = scmp.eq.s32.totalorder %s18, 1
    %p177 = por %p175, %p176
    %p179 = scmp.ne.s32.totalorder %s162, %s178
    %p180 = scmp.eq.s32.totalorder %s18, 0
    %p181 = por %p179, %p180
    %p182 = scmp.le.s32.totalorder 1, %s12
    %p183 = scmp.lt.s32.totalorder %s12, 3
    %p184 = pnand %p182, %p183
    %p185 = pneg %p184
    // Predicated region
    $region9: #{encoder_forward.10} parent=5 // pred_check
      _
    $region10: #{encoder_forward.10} parent=5 // pred_check_branch
      %187 = sbr.rel (%p184) target = $region12
    $region11: #{encoder_forward.10} parent=5 // pred_region
      %s188 = ssub.s32 %s12, 1
      // Predicated region
      $region13: #{encoder_forward.10} parent=11 // pred_check
        %p189 = pneg %p85
      $region14: #{encoder_forward.10} parent=11 // pred_check_branch
        %191 = sbr.rel (%p189) target = $region16
      $region15: #{encoder_forward.10} parent=11 // pred_region
        _
      $region16: #{encoder_forward.10} parent=11 // pred_fallthru
        _
      // Predicated region
      $region17: #{encoder_forward.10} parent=11 // pred_check
        %p192 = pneg %p106
      $region18: #{encoder_forward.10} parent=11 // pred_check_branch
        %194 = sbr.rel (%p192) target = $region20
      $region19: #{encoder_forward.10} parent=11 // pred_region
        _
      $region20: #{encoder_forward.10} parent=11 // pred_fallthru
        _
      // Predicated region
      $region21: #{encoder_forward.10} parent=11 // pred_check
        %p195 = pneg %p127
      $region22: #{encoder_forward.10} parent=11 // pred_check_branch
        %197 = sbr.rel (%p195) target = $region24
      $region23: #{encoder_forward.10} parent=11 // pred_region
        _
      $region24: #{encoder_forward.10} parent=11 // pred_fallthru
        _
      // Predicated region
      $region25: #{encoder_forward.10} parent=11 // pred_check
        %p198 = pneg %p148
      $region26: #{encoder_forward.10} parent=11 // pred_check_branch
        %200 = sbr.rel (%p198) target = $region28
      $region27: #{encoder_forward.10} parent=11 // pred_region
        _
      $region28: #{encoder_forward.10} parent=11 // pred_fallthru
        _
    $region12: #{encoder_forward.10} parent=5 // pred_fallthru
      _
    %p201 = scmp.lt.s32.totalorder %s12, 2
    // Predicated region
    $region29: #{encoder_forward.10} parent=5 // pred_check
      %p202 = pneg %p201
    $region30: #{encoder_forward.10} parent=5 // pred_check_branch
      %204 = sbr.rel (%p202) target = $region32
    $region31: #{encoder_forward.10} parent=5 // pred_region
      // Predicated region
      $region33: #{encoder_forward.10} parent=31 // pred_check
        %p205 = pneg %p32
      $region34: #{encoder_forward.10} parent=31 // pred_check_branch
        %207 = sbr.rel (%p205) target = $region36
      $region35: #{encoder_forward.10} parent=31 // pred_region
        %p208 = scmp.lt.s32.totalorder %s12, 1
        %s209 = scalar_select %p208, %s12, 1
        %s210 = smul.addr %s209, 8
        %s211 = scalar_lea.vmem %s0, %s210
      $region36: #{encoder_forward.10} parent=31 // pred_fallthru
        _
      // Predicated region
      $region37: #{encoder_forward.10} parent=31 // pred_check
        %p212 = pneg %p58
      $region38: #{encoder_forward.10} parent=31 // pred_check_branch
        %214 = sbr.rel (%p212) target = $region40
      $region39: #{encoder_forward.10} parent=31 // pred_region
        %p215 = scmp.lt.s32.totalorder %s12, 1
        %s216 = scalar_select %p215, %s12, 1
        %s217 = smul.addr %s216, 8
        %s218 = scalar_lea.vmem %s1, %s217
      $region40: #{encoder_forward.10} parent=31 // pred_fallthru
        _
    $region32: #{encoder_forward.10} parent=5 // pred_fallthru
      _
    %p219 = scmp.le.s32.totalorder 1, %s12
    %p220 = scmp.lt.s32.totalorder %s12, 3
    %p221 = pnand %p219, %p220
    %p222 = pneg %p221
    // Predicated region
    $region41: #{encoder_forward.10} parent=5 // pred_check
      _
    $region42: #{encoder_forward.10} parent=5 // pred_check_branch
      %224 = sbr.rel (%p221) target = $region44
    $region43: #{encoder_forward.10} parent=5 // pred_region
      %s225 = ssub.s32 %s12, 1
      %p226 = scmp.lt.s32.totalorder %s17, 1
      %s227 = scalar_select %p226, %s17, 1
      %s228 = smul.addr %s227, 8
      %s229 = scalar_lea.vmem %s0, %s228
      %p230 = pneg %p38
      %p231 = pneg %p35
      %p232 = scmp.lt.s32.totalorder %s17, 1
      %s233 = scalar_select %p232, %s17, 1
      %s234 = smul.addr %s233, 8
      %s235 = scalar_lea.vmem %s1, %s234
      %p236 = pneg %p64
      %p237 = pneg %p61
      %p238 = pneg %p85
      %p239 = pneg %p82
      %p240 = pneg %p106
      %p241 = pneg %p103
      %p242 = pneg %p127
      %p243 = pneg %p124
      %p244 = pneg %p148
      %p245 = pneg %p145
      %p246 = pneg %p174
      %p247 = pneg %p171
      %p248 = scmp.lt.s32.totalorder %s17, 1
      %s249 = scalar_select %p248, %s17, 1
      %s250 = smul.addr %s249, 8
      %s251 = scalar_lea.vmem %s6, %s250
      %p252 = scmp.lt.s32.totalorder %s17, 1
      %s253 = scalar_select %p252, %s17, 1
      %s254 = smul.addr %s253, 8
      %s255 = scalar_lea.vmem %s0, %s254
      %p256 = scmp.lt.s32.totalorder %s17, 1
      %s257 = scalar_select %p256, %s17, 1
      %s258 = smul.addr %s257, 8
      %s259 = scalar_lea.vmem %s1, %s258
      %p260 = scmp.lt.s32.totalorder %s17, 1
      %s261 = scalar_select %p260, %s17, 1
      %s262 = smul.addr %s261, 8
      %s263 = scalar_lea.vmem %s6, %s262
      %v264 = vld [vmem:[%s255] sm:$0xff]
      %v265 = vld [vmem:[%s2] sm:$0xff]
      %v266 = vld [vmem:[%s2 + $0x8] sm:$0xff]
      %v267 = vld [vmem:[%s2 + $0x10] sm:$0xff]
      %v268 = vld [vmem:[%s2 + $0x18] sm:$0xff]
      %v269 = vld [vmem:[%s3] sm:$0x1]
      %v271 = vperm.slane %v269, 0
      %vm273 = vcmask 261120
      %v275 = vsel %vm273, %v264, 0
      %277 = vmatpush.msra.mxu0 0.0
      %278 = vmatpush.msra.mxu0 0.0
      %279 = vmatpush.msra.mxu0 0.0
      %280 = vmatpush.msra.mxu0 0.0
      %281 = vmatpush.msra.mxu0 0.0
      %282 = vmatpush.msra.mxu0 0.0
      %283 = vmatpush.msra.mxu0 0.0
      %284 = vmatpush.msra.mxu0 0.0
      %285 = vmatpush.msra.mxu0 0.0
      %286 = vmatpush.msra.mxu0 0.0
      %287 = vmatpush.msra.mxu0 0.0
      %288 = vmatpush.msra.mxu0 0.0
      %289 = vmatpush.msra.mxu0 %v268
      %290 = vmatpush.msra.mxu0 %v267
      %291 = vmatpush.msra.mxu0 %v266
      %292 = vmatpush.msra.mxu0 %v265
      %293 = vmatmul.f32.gmra.mxu0 %v275
      %v294 = vpop.f32.mrf.mxu0
      %v295 = vadd.f32 %v271, %v294
      %296 = vdwg.mxu0
      %v297 = vsel %vm273, %v295, 0.0
      %298 = vadd.xlane.f32.xlu0 %v297
      %v299 = vpop.xlane.xlu0 %298
      %v300 = vrcp.pop 32.0
      %v301 = vmul.f32 32.0, %v300
      %v302 = vsub.f32 1.0, %v301
      %v303 = vmul.f32 %v300, %v302
      %v304 = vadd.f32 %v300, %v303
      %vm305 = vweird.f32 %v300
      %v306 = vsel %vm305, %v300, %v304
      %v307 = vmul.f32 %v299, %v306
      %v308 = vsub.f32 %v295, %v307
      %v309 = vmul.f32 %v308, %v308
      %v310 = vsel %vm273, %v309, 0.0
      %311 = vadd.xlane.f32.xlu0 %v310
      %v312 = vpop.xlane.xlu0 %311
      %v313 = vmul.f32 %v312, %v306
      %v314 = vadd.f32 %v313, 1e-07
      %v315 = vrsqrt.pop %v314
      %v316 = vmul.f32 %v315, %v314
      %v317 = vmul.f32 %v316, %v315
      %v318 = vmul.f32 0.5, %v317
      %v319 = vsub.f32 1.5, %v318
      %v320 = vmul.f32 %v315, %v319
      %vm321 = vweird.f32 %v314
      %vm322 = vweird.f32 %v315
      %vm323 = vmor %vm321, %vm322
      %v324 = vsel %vm323, %v315, %v320
      %v325 = vmul.f32 %v308, %v324
      %v326 = vld [vmem:[%s259] sm:$0xff]
      %v327 = vld [vmem:[%s4] sm:$0x1]
      %v329 = vperm.slane %v327, 0
      %v331 = vmul.f32 %v325, %v329
      %v332 = vadd.f32 %v326, %v331
      %v333 = vld [vmem:[%s5] sm:$0x1]
      %v335 = vperm.slane %v333, 0
      %v337 = vadd.f32 %v332, %v335
      %338 = vst.msk [vmem:[%s263] sm:$0xff] %vm273, %v337
      %p339 = scmp.lt.s32.totalorder %s17, 1
      %s340 = scalar_select %p339, %s17, 1
      %s341 = smul.addr %s340, 8
      %s342 = scalar_lea.vmem %s6, %s341
      // Predicated region
      $region45: #{encoder_forward.10} parent=43 // pred_check
        %p343 = pneg %p171
      $region46: #{encoder_forward.10} parent=43 // pred_check_branch
        %345 = sbr.rel (%p343) target = $region48
      $region47: #{encoder_forward.10} parent=43 // pred_region
        _
      $region48: #{encoder_forward.10} parent=43 // pred_fallthru
        _
    $region44: #{encoder_forward.10} parent=5 // pred_fallthru
      _
    %p346 = scmp.le.s32.totalorder 2, %s12
    // Predicated region
    $region49: #{encoder_forward.10} parent=5 // pred_check
      %p347 = pneg %p346
    $region50: #{encoder_forward.10} parent=5 // pred_check_branch
      %349 = sbr.rel (%p347) target = $region52
    $region51: #{encoder_forward.10} parent=5 // pred_region
      %s350 = ssub.s32 %s12, 2
      // Predicated region
      $region53: #{encoder_forward.10} parent=51 // pred_check
        %p351 = pneg %p177
      $region54: #{encoder_forward.10} parent=51 // pred_check_branch
        %353 = sbr.rel (%p351) target = $region56
      $region55: #{encoder_forward.10} parent=51 // pred_region
        %p354 = scmp.lt.s32.totalorder %s18, 1
        %s355 = scalar_select %p354, %s18, 1
        %s356 = smul.addr %s355, 8
        %s357 = scalar_lea.vmem %s6, %s356
      $region56: #{encoder_forward.10} parent=51 // pred_fallthru
        _
    $region52: #{encoder_forward.10} parent=5 // pred_fallthru
      _
  $region6: #{encoder_forward.10} parent=0 // loop_footer
    %s16 = sadd.s32 1, %s12
  $region7: #{encoder_forward.10} parent=0 // loop_footer_branch
    %11 = sbr.rel target = $region3
  $region8: #{encoder_forward.10} parent=0 // loop_exit
    _

// kernel: encoder_forward.8
$region0: #{encoder_forward.8}
  #allocation0 [shape = 'u32[]', space=smem, size = 0x4, offset = 0x4, fixed_abs, tag = 'smem constant byte address 0x4 - core index']
  #allocation1 [shape = 'u32[72,128]{1,0:T(1,128)}', space=vmem, size = 0x9000, scoped, tag = 'internal scratch']
  %s0 = inlined_call_operand.vmem [shape: f32[16,32], index: 0, kind: input, shape index: {}]
  %s1 = inlined_call_operand.vmem [shape: f32[32,96], index: 1, kind: input, shape index: {}]
  %s2 = inlined_call_operand.vmem [shape: f32[1,96], index: 2, kind: input, shape index: {}]
  %s3 = inlined_call_operand.vmem [shape: f32[16,96], index: 3, kind: output, shape index: {}]
  %s4 = sld [smem:[#allocation0]]
  $region45: #{encoder_forward.8} parent=0
    _
  %s6 = ssub.s32 1, %s4
  %s7 = scalar_select 0, %s6, %s4
  loop: start=0, step=1, limit=4
  $region2: #{encoder_forward.8} parent=0 // loop_pre_header
    _
  $region3: #{encoder_forward.8} parent=0 // loop_header
    %s9 = sphi 0, %s13
    %p10 = scmp.ge.s32.totalorder %s9, 4
    %s19 = sphi 0, %s21
    %s22 = sphi 0, %s19
    %s23 = sphi 0, %s22
    %s39 = sphi 0, %s23
    %s43 = sphi 0, %s43
    %s45 = sphi 0, %s43
    %s46 = sphi 0, %s45
    %s60 = sphi 0, %s46
    %s64 = sphi 0, %s64
    %s66 = sphi 0, %s64
    %s67 = sphi 0, %s66
    %s81 = sphi 0, %s67
    %s87 = sphi 0, %s89
    %s90 = sphi 0, %s87
    %s91 = sphi 0, %s90
    %s107 = sphi 0, %s91
  $region4: #{encoder_forward.8} parent=0 // loop_header_branch
    %12 = sbr.rel (%p10) target = $region8
  $region5: #{encoder_forward.8} parent=0 // loop_body
    %s14 = ssub.s32 %s9, 1
    %s15 = ssub.s32 %s9, 2
    %s16 = sadd.s32 %s9, 1
    %s17 = ssub.s32 %s9, %s16
    %p18 = scmp.eq.s32.totalorder %s17, 0
    %s20 = sadd.s32 %s19, 1
    %s21 = scalar_select %p18, %s19, %s20
    %p24 = pneg %p18
    %p25 = scmp.eq.s32.totalorder %s9, 1
    %p26 = por %p24, %p25
    %p27 = scmp.ne.s32.totalorder %s19, %s22
    %p28 = scmp.eq.s32.totalorder %s9, 0
    %p29 = por %p27, %p28
    %p30 = scmp.ne.s32.totalorder %s19, %s22
    %p31 = scmp.eq.s32.totalorder %s14, 1
    %p32 = por %p30, %p31
    %p33 = scmp.ne.s32.totalorder %s22, %s23
    %p34 = scmp.eq.s32.totalorder %s14, 0
    %p35 = por %p33, %p34
    %p36 = scmp.ne.s32.totalorder %s22, %s23
    %p37 = scmp.eq.s32.totalorder %s15, 1
    %p38 = por %p36, %p37
    %p40 = scmp.ne.s32.totalorder %s23, %s39
    %p41 = scmp.eq.s32.totalorder %s15, 0
    %p42 = por %p40, %p41
    %s44 = sadd.s32 %s43, 1
    %p47 = scmp.eq.s32.totalorder %s9, 1
    %p48 = scmp.ne.s32.totalorder %s43, %s45
    %p49 = scmp.eq.s32.totalorder %s9, 0
    %p50 = por %p48, %p49
    %p51 = scmp.ne.s32.totalorder %s43, %s45
    %p52 = scmp.eq.s32.totalorder %s14, 1
    %p53 = por %p51, %p52
    %p54 = scmp.ne.s32.totalorder %s45, %s46
    %p55 = scmp.eq.s32.totalorder %s14, 0
    %p56 = por %p54, %p55
    %p57 = scmp.ne.s32.totalorder %s45, %s46
    %p58 = scmp.eq.s32.totalorder %s15, 1
    %p59 = por %p57, %p58
    %p61 = scmp.ne.s32.totalorder %s46, %s60
    %p62 = scmp.eq.s32.totalorder %s15, 0
    %p63 = por %p61, %p62
    %s65 = sadd.s32 %s64, 1
    %p68 = scmp.eq.s32.totalorder %s9, 1
    %p69 = scmp.ne.s32.totalorder %s64, %s66
    %p70 = scmp.eq.s32.totalorder %s9, 0
    %p71 = por %p69, %p70
    %p72 = scmp.ne.s32.totalorder %s64, %s66
    %p73 = scmp.eq.s32.totalorder %s14, 1
    %p74 = por %p72, %p73
    %p75 = scmp.ne.s32.totalorder %s66, %s67
    %p76 = scmp.eq.s32.totalorder %s14, 0
    %p77 = por %p75, %p76
    %p78 = scmp.ne.s32.totalorder %s66, %s67
    %p79 = scmp.eq.s32.totalorder %s15, 1
    %p80 = por %p78, %p79
    %p82 = scmp.ne.s32.totalorder %s67, %s81
    %p83 = scmp.eq.s32.totalorder %s15, 0
    %p84 = por %p82, %p83
    %s85 = ssub.s32 %s9, %s16
    %p86 = scmp.eq.s32.totalorder %s85, 0
    %s88 = sadd.s32 %s87, 1
    %s89 = scalar_select %p86, %s87, %s88
    %p92 = pneg %p86
    %p93 = scmp.eq.s32.totalorder %s9, 1
    %p94 = por %p92, %p93
    %p95 = scmp.ne.s32.totalorder %s87, %s90
    %p96 = scmp.eq.s32.totalorder %s9, 0
    %p97 = por %p95, %p96
    %p98 = scmp.ne.s32.totalorder %s87, %s90
    %p99 = scmp.eq.s32.totalorder %s14, 1
    %p100 = por %p98, %p99
    %p101 = scmp.ne.s32.totalorder %s90, %s91
    %p102 = scmp.eq.s32.totalorder %s14, 0
    %p103 = por %p101, %p102
    %p104 = scmp.ne.s32.totalorder %s90, %s91
    %p105 = scmp.eq.s32.totalorder %s15, 1
    %p106 = por %p104, %p105
    %p108 = scmp.ne.s32.totalorder %s91, %s107
    %p109 = scmp.eq.s32.totalorder %s15, 0
    %p110 = por %p108, %p109
    %p111 = scmp.le.s32.totalorder 1, %s9
    %p112 = scmp.lt.s32.totalorder %s9, 3
    %p113 = pnand %p111, %p112
    %p114 = pneg %p113
    // Predicated region
    $region9: #{encoder_forward.8} parent=5 // pred_check
      _
    $region10: #{encoder_forward.8} parent=5 // pred_check_branch
      %116 = sbr.rel (%p113) target = $region12
    $region11: #{encoder_forward.8} parent=5 // pred_region
      %s117 = ssub.s32 %s9, 1
      // Predicated region
      $region13: #{encoder_forward.8} parent=11 // pred_check
        %p118 = pneg %p56
      $region14: #{encoder_forward.8} parent=11 // pred_check_branch
        %120 = sbr.rel (%p118) target = $region16
      $region15: #{encoder_forward.8} parent=11 // pred_region
        _
      $region16: #{encoder_forward.8} parent=11 // pred_fallthru
        _
      // Predicated region
      $region17: #{encoder_forward.8} parent=11 // pred_check
        %p121 = pneg %p77
      $region18: #{encoder_forward.8} parent=11 // pred_check_branch
        %123 = sbr.rel (%p121) target = $region20
      $region19: #{encoder_forward.8} parent=11 // pred_region
        _
      $region20: #{encoder_forward.8} parent=11 // pred_fallthru
        _
    $region12: #{encoder_forward.8} parent=5 // pred_fallthru
      _
    %p124 = scmp.lt.s32.totalorder %s9, 2
    // Predicated region
    $region21: #{encoder_forward.8} parent=5 // pred_check
      %p125 = pneg %p124
    $region22: #{encoder_forward.8} parent=5 // pred_check_branch
      %127 = sbr.rel (%p125) target = $region24
    $region23: #{encoder_forward.8} parent=5 // pred_region
      // Predicated region
      $region25: #{encoder_forward.8} parent=23 // pred_check
        %p128 = pneg %p29
      $region26: #{encoder_forward.8} parent=23 // pred_check_branch
        %130 = sbr.rel (%p128) target = $region28
      $region27: #{encoder_forward.8} parent=23 // pred_region
        %p131 = scmp.lt.s32.totalorder %s9, 1
        %s132 = scalar_select %p131, %s9, 1
        %s133 = smul.addr %s132, 8
        %s134 = scalar_lea.vmem %s0, %s133
      $region28: #{encoder_forward.8} parent=23 // pred_fallthru
        _
    $region24: #{encoder_forward.8} parent=5 // pred_fallthru
      _
    %p135 = scmp.le.s32.totalorder 1, %s9
    %p136 = scmp.lt.s32.totalorder %s9, 3
    %p137 = pnand %p135, %p136
    %p138 = pneg %p137
    // Predicated region
    $region29: #{encoder_forward.8} parent=5 // pred_check
      _
    $region30: #{encoder_forward.8} parent=5 // pred_check_branch
      %140 = sbr.rel (%p137) target = $region32
    $region31: #{encoder_forward.8} parent=5 // pred_region
      %s141 = ssub.s32 %s9, 1
      %p142 = scmp.lt.s32.totalorder %s14, 1
      %s143 = scalar_select %p142, %s14, 1
      %s144 = smul.addr %s143, 8
      %s145 = scalar_lea.vmem %s0, %s144
      %p146 = pneg %p35
      %p147 = pneg %p32
      %p148 = pneg %p56
      %p149 = pneg %p53
      %p150 = pneg %p77
      %p151 = pneg %p74
      %p152 = pneg %p103
      %p153 = pneg %p100
      %p154 = scmp.lt.s32.totalorder %s14, 1
      %s155 = scalar_select %p154, %s14, 1
      %s156 = smul.addr %s155, 8
      %s157 = scalar_lea.vmem %s3, %s156
      %p158 = scmp.lt.s32.totalorder %s14, 1
      %s159 = scalar_select %p158, %s14, 1
      %s160 = smul.addr %s159, 8
      %s161 = scalar_lea.vmem %s0, %s160
      %p162 = scmp.lt.s32.totalorder %s14, 1
      %s163 = scalar_select %p162, %s14, 1
      %s164 = smul.addr %s163, 8
      %s165 = scalar_lea.vmem %s3, %s164
      %v166 = vld [vmem:[%s161] sm:$0xff]
      %vm167 = vcmask 261120
      %v168 = vsel %vm167, %v166, 0.0
      %169 = vadd.xlane.f32.xlu0 %v168
      %v170 = vpop.xlane.xlu0 %169
      %v171 = vrcp.pop 32.0
      %v172 = vmul.f32 32.0, %v171
      %v173 = vsub.f32 1.0, %v172
      %v174 = vmul.f32 %v171, %v173
      %v175 = vadd.f32 %v171, %v174
      %vm176 = vweird.f32 %v171
      %v177 = vsel %vm176, %v171, %v175
      %v178 = vmul.f32 %v170, %v177
      %v179 = vsub.f32 %v166, %v178
      %v180 = vmul.f32 %v179, %v179
      %v181 = vsel %vm167, %v180, 0.0
      %182 = vadd.xlane.f32.xlu0 %v181
      %v183 = vpop.xlane.xlu0 %182
      %v184 = vmul.f32 %v183, %v177
      %v185 = vadd.f32 %v184, 1e-07
      %v186 = vrsqrt.pop %v185
      %v187 = vmul.f32 %v186, %v185
      %v188 = vmul.f32 %v187, %v186
      %v189 = vmul.f32 0.5, %v188
      %v190 = vsub.f32 1.5, %v189
      %v191 = vmul.f32 %v186, %v190
      %vm192 = vweird.f32 %v185
      %vm193 = vweird.f32 %v186
      %vm194 = vmor %vm192, %vm193
      %v195 = vsel %vm194, %v186, %v191
      %v196 = vmul.f32 %v179, %v195
      %v197 = vld [vmem:[%s1] sm:$0xff]
      %v198 = vld [vmem:[%s1 + $0x8] sm:$0xff]
      %v199 = vld [vmem:[%s1 + $0x10] sm:$0xff]
      %v200 = vld [vmem:[%s1 + $0x18] sm:$0xff]
      %v201 = vld [vmem:[%s2] sm:$0x1]
      %v203 = vperm.slane %v201, 0
      %v206 = vsel %vm167, %v196, 0
      %208 = vmatpush.msra.mxu0 0.0
      %209 = vmatpush.msra.mxu0 0.0
      %210 = vmatpush.msra.mxu0 0.0
      %211 = vmatpush.msra.mxu0 0.0
      %212 = vmatpush.msra.mxu0 0.0
      %213 = vmatpush.msra.mxu0 0.0
      %214 = vmatpush.msra.mxu0 0.0
      %215 = vmatpush.msra.mxu0 0.0
      %216 = vmatpush.msra.mxu0 0.0
      %217 = vmatpush.msra.mxu0 0.0
      %218 = vmatpush.msra.mxu0 0.0
      %219 = vmatpush.msra.mxu0 0.0
      %220 = vmatpush.msra.mxu0 %v200
      %221 = vmatpush.msra.mxu0 %v199
      %222 = vmatpush.msra.mxu0 %v198
      %223 = vmatpush.msra.mxu0 %v197
      %224 = vmatmul.f32.gmra.mxu0 %v206
      %v225 = vpop.f32.mrf.mxu0
      %v226 = vadd.f32 %v203, %v225
      %227 = vdwg.mxu0
      %vm228 = vcmask 785408
      %229 = vst.msk [vmem:[%s165] sm:$0xff] %vm228, %v226
      %p230 = scmp.lt.s32.totalorder %s14, 1
      %s231 = scalar_select %p230, %s14, 1
      %s232 = smul.addr %s231, 8
      %s233 = scalar_lea.vmem %s3, %s232
      // Predicated region
      $region33: #{encoder_forward.8} parent=31 // pred_check
        %p234 = pneg %p100
      $region34: #{encoder_forward.8} parent=31 // pred_check_branch
        %236 = sbr.rel (%p234) target = $region36
      $region35: #{encoder_forward.8} parent=31 // pred_region
        _
      $region36: #{encoder_forward.8} parent=31 // pred_fallthru
        _
    $region32: #{encoder_forward.8} parent=5 // pred_fallthru
      _
    %p237 = scmp.le.s32.totalorder 2, %s9
    // Predicated region
    $region37: #{encoder_forward.8} parent=5 // pred_check
      %p238 = pneg %p237
    $region38: #{encoder_forward.8} parent=5 // pred_check_branch
      %240 = sbr.rel (%p238) target = $region40
    $region39: #{encoder_forward.8} parent=5 // pred_region
      %s241 = ssub.s32 %s9, 2
      // Predicated region
      $region41: #{encoder_forward.8} parent=39 // pred_check
        %p242 = pneg %p106
      $region42: #{encoder_forward.8} parent=39 // pred_check_branch
        %244 = sbr.rel (%p242) target = $region44
      $region43: #{encoder_forward.8} parent=39 // pred_region
        %p245 = scmp.lt.s32.totalorder %s15, 1
        %s246 = scalar_select %p245, %s15, 1
        %s247 = smul.addr %s246, 8
        %s248 = scalar_lea.vmem %s3, %s247
      $region44: #{encoder_forward.8} parent=39 // pred_fallthru
        _
    $region40: #{encoder_forward.8} parent=5 // pred_fallthru
      _
  $region6: #{encoder_forward.8} parent=0 // loop_footer
    %s13 = sadd.s32 1, %s9
  $region7: #{encoder_forward.8} parent=0 // loop_footer_branch
    %8 = sbr.rel target = $region3
  $region8: #{encoder_forward.8} parent=0 // loop_exit
    _

// kernel: encoder_forward.11
$region0: #{encoder_forward.11}
  #allocation0 [shape = 'u32[]', space=smem, size = 0x4, offset = 0x4, fixed_abs, tag = 'smem constant byte address 0x4 - core index']
  #allocation1 [shape = 'u32[72,128]{1,0:T(1,128)}', space=vmem, size = 0x9000, scoped, tag = 'internal scratch']
  %s0 = inlined_call_operand.vmem [shape: f32[16,32], index: 0, kind: input, shape index: {}]
  %s1 = inlined_call_operand.vmem [shape: f32[32,128], index: 1, kind: input, shape index: {}]
  %s2 = inlined_call_operand.vmem [shape: f32[64,32], index: 2, kind: input, shape index: {}]
  %s3 = inlined_call_operand.vmem [shape: f32[16,32], index: 3, kind: output, shape index: {}]
  %s4 = sld [smem:[#allocation0]]
  $region45: #{encoder_forward.11} parent=0
    _
  %s6 = ssub.s32 1, %s4
  %s7 = scalar_select 0, %s6, %s4
  loop: start=0, step=1, limit=4
  $region2: #{encoder_forward.11} parent=0 // loop_pre_header
    _
  $region3: #{encoder_forward.11} parent=0 // loop_header
    %s9 = sphi 0, %s13
    %p10 = scmp.ge.s32.totalorder %s9, 4
    %s19 = sphi 0, %s21
    %s22 = sphi 0, %s19
    %s23 = sphi 0, %s22
    %s39 = sphi 0, %s23
    %s43 = sphi 0, %s43
    %s45 = sphi 0, %s43
    %s46 = sphi 0, %s45
    %s60 = sphi 0, %s46
    %s64 = sphi 0, %s64
    %s66 = sphi 0, %s64
    %s67 = sphi 0, %s66
    %s81 = sphi 0, %s67
    %s87 = sphi 0, %s89
    %s90 = sphi 0, %s87
    %s91 = sphi 0, %s90
    %s107 = sphi 0, %s91
  $region4: #{encoder_forward.11} parent=0 // loop_header_branch
    %12 = sbr.rel (%p10) target = $region8
  $region5: #{encoder_forward.11} parent=0 // loop_body
    %s14 = ssub.s32 %s9, 1
    %s15 = ssub.s32 %s9, 2
    %s16 = sadd.s32 %s9, 1
    %s17 = ssub.s32 %s9, %s16
    %p18 = scmp.eq.s32.totalorder %s17, 0
    %s20 = sadd.s32 %s19, 1
    %s21 = scalar_select %p18, %s19, %s20
    %p24 = pneg %p18
    %p25 = scmp.eq.s32.totalorder %s9, 1
    %p26 = por %p24, %p25
    %p27 = scmp.ne.s32.totalorder %s19, %s22
    %p28 = scmp.eq.s32.totalorder %s9, 0
    %p29 = por %p27, %p28
    %p30 = scmp.ne.s32.totalorder %s19, %s22
    %p31 = scmp.eq.s32.totalorder %s14, 1
    %p32 = por %p30, %p31
    %p33 = scmp.ne.s32.totalorder %s22, %s23
    %p34 = scmp.eq.s32.totalorder %s14, 0
    %p35 = por %p33, %p34
    %p36 = scmp.ne.s32.totalorder %s22, %s23
    %p37 = scmp.eq.s32.totalorder %s15, 1
    %p38 = por %p36, %p37
    %p40 = scmp.ne.s32.totalorder %s23, %s39
    %p41 = scmp.eq.s32.totalorder %s15, 0
    %p42 = por %p40, %p41
    %s44 = sadd.s32 %s43, 1
    %p47 = scmp.eq.s32.totalorder %s9, 1
    %p48 = scmp.ne.s32.totalorder %s43, %s45
    %p49 = scmp.eq.s32.totalorder %s9, 0
    %p50 = por %p48, %p49
    %p51 = scmp.ne.s32.totalorder %s43, %s45
    %p52 = scmp.eq.s32.totalorder %s14, 1
    %p53 = por %p51, %p52
    %p54 = scmp.ne.s32.totalorder %s45, %s46
    %p55 = scmp.eq.s32.totalorder %s14, 0
    %p56 = por %p54, %p55
    %p57 = scmp.ne.s32.totalorder %s45, %s46
    %p58 = scmp.eq.s32.totalorder %s15, 1
    %p59 = por %p57, %p58
    %p61 = scmp.ne.s32.totalorder %s46, %s60
    %p62 = scmp.eq.s32.totalorder %s15, 0
    %p63 = por %p61, %p62
    %s65 = sadd.s32 %s64, 1
    %p68 = scmp.eq.s32.totalorder %s9, 1
    %p69 = scmp.ne.s32.totalorder %s64, %s66
    %p70 = scmp.eq.s32.totalorder %s9, 0
    %p71 = por %p69, %p70
    %p72 = scmp.ne.s32.totalorder %s64, %s66
    %p73 = scmp.eq.s32.totalorder %s14, 1
    %p74 = por %p72, %p73
    %p75 = scmp.ne.s32.totalorder %s66, %s67
    %p76 = scmp.eq.s32.totalorder %s14, 0
    %p77 = por %p75, %p76
    %p78 = scmp.ne.s32.totalorder %s66, %s67
    %p79 = scmp.eq.s32.totalorder %s15, 1
    %p80 = por %p78, %p79
    %p82 = scmp.ne.s32.totalorder %s67, %s81
    %p83 = scmp.eq.s32.totalorder %s15, 0
    %p84 = por %p82, %p83
    %s85 = ssub.s32 %s9, %s16
    %p86 = scmp.eq.s32.totalorder %s85, 0
    %s88 = sadd.s32 %s87, 1
    %s89 = scalar_select %p86, %s87, %s88
    %p92 = pneg %p86
    %p93 = scmp.eq.s32.totalorder %s9, 1
    %p94 = por %p92, %p93
    %p95 = scmp.ne.s32.totalorder %s87, %s90
    %p96 = scmp.eq.s32.totalorder %s9, 0
    %p97 = por %p95, %p96
    %p98 = scmp.ne.s32.totalorder %s87, %s90
    %p99 = scmp.eq.s32.totalorder %s14, 1
    %p100 = por %p98, %p99
    %p101 = scmp.ne.s32.totalorder %s90, %s91
    %p102 = scmp.eq.s32.totalorder %s14, 0
    %p103 = por %p101, %p102
    %p104 = scmp.ne.s32.totalorder %s90, %s91
    %p105 = scmp.eq.s32.totalorder %s15, 1
    %p106 = por %p104, %p105
    %p108 = scmp.ne.s32.totalorder %s91, %s107
    %p109 = scmp.eq.s32.totalorder %s15, 0
    %p110 = por %p108, %p109
    %p111 = scmp.le.s32.totalorder 1, %s9
    %p112 = scmp.lt.s32.totalorder %s9, 3
    %p113 = pnand %p111, %p112
    %p114 = pneg %p113
    // Predicated region
    $region9: #{encoder_forward.11} parent=5 // pred_check
      _
    $region10: #{encoder_forward.11} parent=5 // pred_check_branch
      %116 = sbr.rel (%p113) target = $region12
    $region11: #{encoder_forward.11} parent=5 // pred_region
      %s117 = ssub.s32 %s9, 1
      // Predicated region
      $region13: #{encoder_forward.11} parent=11 // pred_check
        %p118 = pneg %p56
      $region14: #{encoder_forward.11} parent=11 // pred_check_branch
        %120 = sbr.rel (%p118) target = $region16
      $region15: #{encoder_forward.11} parent=11 // pred_region
        _
      $region16: #{encoder_forward.11} parent=11 // pred_fallthru
        _
      // Predicated region
      $region17: #{encoder_forward.11} parent=11 // pred_check
        %p121 = pneg %p77
      $region18: #{encoder_forward.11} parent=11 // pred_check_branch
        %123 = sbr.rel (%p121) target = $region20
      $region19: #{encoder_forward.11} parent=11 // pred_region
        _
      $region20: #{encoder_forward.11} parent=11 // pred_fallthru
        _
    $region12: #{encoder_forward.11} parent=5 // pred_fallthru
      _
    %p124 = scmp.lt.s32.totalorder %s9, 2
    // Predicated region
    $region21: #{encoder_forward.11} parent=5 // pred_check
      %p125 = pneg %p124
    $region22: #{encoder_forward.11} parent=5 // pred_check_branch
      %127 = sbr.rel (%p125) target = $region24
    $region23: #{encoder_forward.11} parent=5 // pred_region
      // Predicated region
      $region25: #{encoder_forward.11} parent=23 // pred_check
        %p128 = pneg %p29
      $region26: #{encoder_forward.11} parent=23 // pred_check_branch
        %130 = sbr.rel (%p128) target = $region28
      $region27: #{encoder_forward.11} parent=23 // pred_region
        %p131 = scmp.lt.s32.totalorder %s9, 1
        %s132 = scalar_select %p131, %s9, 1
        %s133 = smul.addr %s132, 8
        %s134 = scalar_lea.vmem %s0, %s133
      $region28: #{encoder_forward.11} parent=23 // pred_fallthru
        _
    $region24: #{encoder_forward.11} parent=5 // pred_fallthru
      _
    %p135 = scmp.le.s32.totalorder 1, %s9
    %p136 = scmp.lt.s32.totalorder %s9, 3
    %p137 = pnand %p135, %p136
    %p138 = pneg %p137
    // Predicated region
    $region29: #{encoder_forward.11} parent=5 // pred_check
      _
    $region30: #{encoder_forward.11} parent=5 // pred_check_branch
      %140 = sbr.rel (%p137) target = $region32
    $region31: #{encoder_forward.11} parent=5 // pred_region
      %s141 = ssub.s32 %s9, 1
      %p142 = scmp.lt.s32.totalorder %s14, 1
      %s143 = scalar_select %p142, %s14, 1
      %s144 = smul.addr %s143, 8
      %s145 = scalar_lea.vmem %s0, %s144
      %p146 = pneg %p35
      %p147 = pneg %p32
      %p148 = pneg %p56
      %p149 = pneg %p53
      %p150 = pneg %p77
      %p151 = pneg %p74
      %p152 = pneg %p103
      %p153 = pneg %p100
      %p154 = scmp.lt.s32.totalorder %s14, 1
      %s155 = scalar_select %p154, %s14, 1
      %s156 = smul.addr %s155, 8
      %s157 = scalar_lea.vmem %s3, %s156
      %p158 = scmp.lt.s32.totalorder %s14, 1
      %s159 = scalar_select %p158, %s14, 1
      %s160 = smul.addr %s159, 8
      %s161 = scalar_lea.vmem %s0, %s160
      %p162 = scmp.lt.s32.totalorder %s14, 1
      %s163 = scalar_select %p162, %s14, 1
      %s164 = smul.addr %s163, 8
      %s165 = scalar_lea.vmem %s3, %s164
      %v166 = vld [vmem:[%s161] sm:$0xff]
      %vm167 = vcmask 261120
      %v168 = vsel %vm167, %v166, 0.0
      %169 = vadd.xlane.f32.xlu0 %v168
      %v170 = vpop.xlane.xlu0 %169
      %v171 = vrcp.pop 32.0
      %v172 = vmul.f32 32.0, %v171
      %v173 = vsub.f32 1.0, %v172
      %v174 = vmul.f32 %v171, %v173
      %v175 = vadd.f32 %v171, %v174
      %vm176 = vweird.f32 %v171
      %v177 = vsel %vm176, %v171, %v175
      %v178 = vmul.f32 %v170, %v177
      %v179 = vsub.f32 %v166, %v178
      %v180 = vmul.f32 %v179, %v179
      %v181 = vsel %vm167, %v180, 0.0
      %182 = vadd.xlane.f32.xlu0 %v181
      %v183 = vpop.xlane.xlu0 %182
      %v184 = vmul.f32 %v183, %v177
      %v185 = vadd.f32 %v184, 1e-07
      %v186 = vrsqrt.pop %v185
      %v187 = vmul.f32 %v186, %v185
      %v188 = vmul.f32 %v187, %v186
      %v189 = vmul.f32 0.5, %v188
      %v190 = vsub.f32 1.5, %v189
      %v191 = vmul.f32 %v186, %v190
      %vm192 = vweird.f32 %v185
      %vm193 = vweird.f32 %v186
      %vm194 = vmor %vm192, %vm193
      %v195 = vsel %vm194, %v186, %v191
      %v196 = vmul.f32 %v179, %v195
      %v197 = vld [vmem:[%s1] sm:$0xff]
      %v198 = vld [vmem:[%s1 + $0x8] sm:$0xff]
      %v199 = vld [vmem:[%s1 + $0x10] sm:$0xff]
      %v200 = vld [vmem:[%s1 + $0x18] sm:$0xff]
      %v202 = vsel %vm167, %v196, 0
      %204 = vmatpush.msra.mxu0 0.0
      %205 = vmatpush.msra.mxu0 0.0
      %206 = vmatpush.msra.mxu0 0.0
      %207 = vmatpush.msra.mxu0 0.0
      %208 = vmatpush.msra.mxu0 0.0
      %209 = vmatpush.msra.mxu0 0.0
      %210 = vmatpush.msra.mxu0 0.0
      %211 = vmatpush.msra.mxu0 0.0
      %212 = vmatpush.msra.mxu0 0.0
      %213 = vmatpush.msra.mxu0 0.0
      %214 = vmatpush.msra.mxu0 0.0
      %215 = vmatpush.msra.mxu0 0.0
      %216 = vmatpush.msra.mxu0 %v200
      %217 = vmatpush.msra.mxu0 %v199
      %218 = vmatpush.msra.mxu0 %v198
      %219 = vmatpush.msra.mxu0 %v197
      %220 = vmatmul.f32.gmra.mxu0 %v202
      %v221 = vpop.f32.mrf.mxu0
      %v222 = vadd.f32 0.0, %v221
      %223 = vdwg.mxu0
      %v224 = vmul.f32 %v222, 0.5
      %v225 = vmul.f32 %v222, 0.044715
      %v226 = vmul.f32 %v225, %v222
      %v227 = vmul.f32 %v226, %v222
      %v228 = vadd.f32 %v222, %v227
      %v229 = vmul.f32 %v228, 0.7978846
      %v230 = vtanh.pop %v229
      %v231 = vadd.f32 %v230, 1.0
      %v232 = vmul.f32 %v224, %v231
      %234 = vrot.lane.b32.xlu0 %v232, 64
      %v235 = vpop.permute.xlu0 %234
      %v237 = vmul.f32 %v222, %v235
      %vm238 = vcmask 523264
      %v239 = vsel %vm238, %v237, 0.0
      %240 = vadd.xlane.f32.xlu0 %v239
      %v241 = vpop.xlane.xlu0 %240
      %v242 = vrcp.pop 64.0
      %v243 = vmul.f32 64.0, %v242
      %v244 = vsub.f32 1.0, %v243
      %v245 = vmul.f32 %v242, %v244
      %v246 = vadd.f32 %v242, %v245
      %vm247 = vweird.f32 %v242
      %v248 = vsel %vm247, %v242, %v246
      %v249 = vmul.f32 %v241, %v248
      %v250 = vsub.f32 %v237, %v249
      %v251 = vmul.f32 %v250, %v250
      %v252 = vsel %vm238, %v251, 0.0
      %253 = vadd.xlane.f32.xlu0 %v252
      %v254 = vpop.xlane.xlu0 %253
      %v255 = vmul.f32 %v254, %v248
      %v256 = vadd.f32 %v255, 1e-07
      %v257 = vrsqrt.pop %v256
      %v258 = vmul.f32 %v257, %v256
      %v259 = vmul.f32 %v258, %v257
      %v260 = vmul.f32 0.5, %v259
      %v261 = vsub.f32 1.5, %v260
      %v262 = vmul.f32 %v257, %v261
      %vm263 = vweird.f32 %v256
      %vm264 = vweird.f32 %v257
      %vm265 = vmor %vm263, %vm264
      %v266 = vsel %vm265, %v257, %v262
      %v267 = vmul.f32 %v250, %v266
      %v268 = vld [vmem:[%s2] sm:$0xff]
      %v269 = vld [vmem:[%s2 + $0x8] sm:$0xff]
      %v270 = vld [vmem:[%s2 + $0x10] sm:$0xff]
      %v271 = vld [vmem:[%s2 + $0x18] sm:$0xff]
      %v272 = vld [vmem:[%s2 + $0x20] sm:$0xff]
      %v273 = vld [vmem:[%s2 + $0x28] sm:$0xff]
      %v274 = vld [vmem:[%s2 + $0x30] sm:$0xff]
      %v275 = vld [vmem:[%s2 + $0x38] sm:$0xff]
      %v277 = vsel %vm238, %v267, 0
      %279 = vmatpush.msra.mxu0 0.0
      %280 = vmatpush.msra.mxu0 0.0
      %281 = vmatpush.msra.mxu0 0.0
      %282 = vmatpush.msra.mxu0 0.0
      %283 = vmatpush.msra.mxu0 0.0
      %284 = vmatpush.msra.mxu0 0.0
      %285 = vmatpush.msra.mxu0 0.0
      %286 = vmatpush.msra.mxu0 0.0
      %287 = vmatpush.msra.mxu0 %v275
      %288 = vmatpush.msra.mxu0 %v274
      %289 = vmatpush.msra.mxu0 %v273
      %290 = vmatpush.msra.mxu0 %v272
      %291 = vmatpush.msra.mxu0 %v271
      %292 = vmatpush.msra.mxu0 %v270
      %293 = vmatpush.msra.mxu0 %v269
      %294 = vmatpush.msra.mxu0 %v268
      %295 = vmatmul.f32.gmra.mxu0 %v277
      %v296 = vpop.f32.mrf.mxu0
      %v297 = vadd.f32 0.0, %v296
      %298 = vdwg.mxu0
      %v299 = vadd.f32 %v166, %v297
      %300 = vst.msk [vmem:[%s165] sm:$0xff] %vm167, %v299
      %p301 = scmp.lt.s32.totalorder %s14, 1
      %s302 = scalar_select %p301, %s14, 1
      %s303 = smul.addr %s302, 8
      %s304 = scalar_lea.vmem %s3, %s303
      // Predicated region
      $region33: #{encoder_forward.11} parent=31 // pred_check
        %p305 = pneg %p100
      $region34: #{encoder_forward.11} parent=31 // pred_check_branch
        %307 = sbr.rel (%p305) target = $region36
      $region35: #{encoder_forward.11} parent=31 // pred_region
        _
      $region36: #{encoder_forward.11} parent=31 // pred_fallthru
        _
    $region32: #{encoder_forward.11} parent=5 // pred_fallthru
      _
    %p308 = scmp.le.s32.totalorder 2, %s9
    // Predicated region
    $region37: #{encoder_forward.11} parent=5 // pred_check
      %p309 = pneg %p308
    $region38: #{encoder_forward.11} parent=5 // pred_check_branch
      %311 = sbr.rel (%p309) target = $region40
    $region39: #{encoder_forward.11} parent=5 // pred_region
      %s312 = ssub.s32 %s9, 2
      // Predicated region
      $region41: #{encoder_forward.11} parent=39 // pred_check
        %p313 = pneg %p106
      $region42: #{encoder_forward.11} parent=39 // pred_check_branch
        %315 = sbr.rel (%p313) target = $region44
      $region43: #{encoder_forward.11} parent=39 // pred_region
        %p316 = scmp.lt.s32.totalorder %s15, 1
        %s317 = scalar_select %p316, %s15, 1
        %s318 = smul.addr %s317, 8
        %s319 = scalar_lea.vmem %s3, %s318
      $region44: #{encoder_forward.11} parent=39 // pred_fallthru
        _
    $region40: #{encoder_forward.11} parent=5 // pred_fallthru
      _
  $region6: #{encoder_forward.11} parent=0 // loop_footer
    %s13 = sadd.s32 1, %s9
  $region7: #{encoder_forward.11} parent=0 // loop_footer_branch
    %8 = sbr.rel target = $region3
  $region8: #{encoder_forward.11} parent=0 // loop_exit
    _

// kernel: encoder_forward.9
$region0: #{encoder_forward.9}
  #allocation0 [shape = 'u32[]', space=smem, size = 0x4, offset = 0x4, fixed_abs, tag = 'smem constant byte address 0x4 - core index']
  #allocation1 [shape = 'u32[72,128]{1,0:T(1,128)}', space=vmem, size = 0x9000, scoped, tag = 'internal scratch']
  %s0 = inlined_call_operand.vmem [shape: f32[16,96], index: 0, kind: input, shape index: {}]
  %s1 = inlined_call_operand.vmem [shape: f32[15,32], index: 1, kind: input, shape index: {}]
  %s2 = inlined_call_operand.vmem [shape: f32[15,32], index: 2, kind: input, shape index: {}]
  %s3 = inlined_call_operand.vmem [shape: f32[2,1,8], index: 3, kind: input, shape index: {}]
  %s4 = inlined_call_operand.vmem [shape: f32[16,32], index: 4, kind: output, shape index: {}]
  %s5 = sld [smem:[#allocation0]]
  $region49: #{encoder_forward.9} parent=0
    _
  %s7 = ssub.s32 1, %s5
  %s8 = scalar_select 0, %s7, %s5
  loop: start=0, step=1, limit=4
  $region2: #{encoder_forward.9} parent=0 // loop_pre_header
    _
  $region3: #{encoder_forward.9} parent=0 // loop_header
    %s10 = sphi 0, %s14
    %p11 = scmp.ge.s32.totalorder %s10, 4
    %s20 = sphi 0, %s22
    %s23 = sphi 0, %s20
    %s24 = sphi 0, %s23
    %s40 = sphi 0, %s24
    %s44 = sphi 0, %s44
    %s46 = sphi 0, %s44
    %s47 = sphi 0, %s46
    %s61 = sphi 0, %s47
    %s65 = sphi 0, %s65
    %s67 = sphi 0, %s65
    %s68 = sphi 0, %s67
    %s82 = sphi 0, %s68
    %s88 = sphi 0, %s90
    %s91 = sphi 0, %s88
    %s92 = sphi 0, %s91
    %s108 = sphi 0, %s92
    %s114 = sphi 0, %s116
    %s117 = sphi 0, %s114
    %s118 = sphi 0, %s117
    %s134 = sphi 0, %s118
  $region4: #{encoder_forward.9} parent=0 // loop_header_branch
    %13 = sbr.rel (%p11) target = $region8
  $region5: #{encoder_forward.9} parent=0 // loop_body
    %s15 = ssub.s32 %s10, 1
    %s16 = ssub.s32 %s10, 2
    %s17 = sadd.s32 %s10, 1
    %s18 = ssub.s32 %s10, %s17
    %p19 = scmp.eq.s32.totalorder %s18, 0
    %s21 = sadd.s32 %s20, 1
    %s22 = scalar_select %p19, %s20, %s21
    %p25 = pneg %p19
    %p26 = scmp.eq.s32.totalorder %s10, 1
    %p27 = por %p25, %p26
    %p28 = scmp.ne.s32.totalorder %s20, %s23
    %p29 = scmp.eq.s32.totalorder %s10, 0
    %p30 = por %p28, %p29
    %p31 = scmp.ne.s32.totalorder %s20, %s23
    %p32 = scmp.eq.s32.totalorder %s15, 1
    %p33 = por %p31, %p32
    %p34 = scmp.ne.s32.totalorder %s23, %s24
    %p35 = scmp.eq.s32.totalorder %s15, 0
    %p36 = por %p34, %p35
    %p37 = scmp.ne.s32.totalorder %s23, %s24
    %p38 = scmp.eq.s32.totalorder %s16, 1
    %p39 = por %p37, %p38
    %p41 = scmp.ne.s32.totalorder %s24, %s40
    %p42 = scmp.eq.s32.totalorder %s16, 0
    %p43 = por %p41, %p42
    %s45 = sadd.s32 %s44, 1
    %p48 = scmp.eq.s32.totalorder %s10, 1
    %p49 = scmp.ne.s32.totalorder %s44, %s46
    %p50 = scmp.eq.s32.totalorder %s10, 0
    %p51 = por %p49, %p50
    %p52 = scmp.ne.s32.totalorder %s44, %s46
    %p53 = scmp.eq.s32.totalorder %s15, 1
    %p54 = por %p52, %p53
    %p55 = scmp.ne.s32.totalorder %s46, %s47
    %p56 = scmp.eq.s32.totalorder %s15, 0
    %p57 = por %p55, %p56
    %p58 = scmp.ne.s32.totalorder %s46, %s47
    %p59 = scmp.eq.s32.totalorder %s16, 1
    %p60 = por %p58, %p59
    %p62 = scmp.ne.s32.totalorder %s47, %s61
    %p63 = scmp.eq.s32.totalorder %s16, 0
    %p64 = por %p62, %p63
    %s66 = sadd.s32 %s65, 1
    %p69 = scmp.eq.s32.totalorder %s10, 1
    %p70 = scmp.ne.s32.totalorder %s65, %s67
    %p71 = scmp.eq.s32.totalorder %s10, 0
    %p72 = por %p70, %p71
    %p73 = scmp.ne.s32.totalorder %s65, %s67
    %p74 = scmp.eq.s32.totalorder %s15, 1
    %p75 = por %p73, %p74
    %p76 = scmp.ne.s32.totalorder %s67, %s68
    %p77 = scmp.eq.s32.totalorder %s15, 0
    %p78 = por %p76, %p77
    %p79 = scmp.ne.s32.totalorder %s67, %s68
    %p80 = scmp.eq.s32.totalorder %s16, 1
    %p81 = por %p79, %p80
    %p83 = scmp.ne.s32.totalorder %s68, %s82
    %p84 = scmp.eq.s32.totalorder %s16, 0
    %p85 = por %p83, %p84
    %s86 = ssub.s32 %s10, %s17
    %p87 = scmp.eq.s32.totalorder %s86, 0
    %s89 = sadd.s32 %s88, 1
    %s90 = scalar_select %p87, %s88, %s89
    %p93 = pneg %p87
    %p94 = scmp.eq.s32.totalorder %s10, 1
    %p95 = por %p93, %p94
    %p96 = scmp.ne.s32.totalorder %s88, %s91
    %p97 = scmp.eq.s32.totalorder %s10, 0
    %p98 = por %p96, %p97
    %p99 = scmp.ne.s32.totalorder %s88, %s91
    %p100 = scmp.eq.s32.totalorder %s15, 1
    %p101 = por %p99, %p100
    %p102 = scmp.ne.s32.totalorder %s91, %s92
    %p103 = scmp.eq.s32.totalorder %s15, 0
    %p104 = por %p102, %p103
    %p105 = scmp.ne.s32.totalorder %s91, %s92
    %p106 = scmp.eq.s32.totalorder %s16, 1
    %p107 = por %p105, %p106
    %p109 = scmp.ne.s32.totalorder %s92, %s108
    %p110 = scmp.eq.s32.totalorder %s16, 0
    %p111 = por %p109, %p110
    %s112 = ssub.s32 %s10, %s17
    %p113 = scmp.eq.s32.totalorder %s112, 0
    %s115 = sadd.s32 %s114, 1
    %s116 = scalar_select %p113, %s114, %s115
    %p119 = pneg %p113
    %p120 = scmp.eq.s32.totalorder %s10, 1
    %p121 = por %p119, %p120
    %p122 = scmp.ne.s32.totalorder %s114, %s117
    %p123 = scmp.eq.s32.totalorder %s10, 0
    %p124 = por %p122, %p123
    %p125 = scmp.ne.s32.totalorder %s114, %s117
    %p126 = scmp.eq.s32.totalorder %s15, 1
    %p127 = por %p125, %p126
    %p128 = scmp.ne.s32.totalorder %s117, %s118
    %p129 = scmp.eq.s32.totalorder %s15, 0
    %p130 = por %p128, %p129
    %p131 = scmp.ne.s32.totalorder %s117, %s118
    %p132 = scmp.eq.s32.totalorder %s16, 1
    %p133 = por %p131, %p132
    %p135 = scmp.ne.s32.totalorder %s118, %s134
    %p136 = scmp.eq.s32.totalorder %s16, 0
    %p137 = por %p135, %p136
    %p138 = scmp.le.s32.totalorder 1, %s10
    %p139 = scmp.lt.s32.totalorder %s10, 3
    %p140 = pnand %p138, %p139
    %p141 = pneg %p140
    // Predicated region
    $region9: #{encoder_forward.9} parent=5 // pred_check
      _
    $region10: #{encoder_forward.9} parent=5 // pred_check_branch
      %143 = sbr.rel (%p140) target = $region12
    $region11: #{encoder_forward.9} parent=5 // pred_region
      %s144 = ssub.s32 %s10, 1
      // Predicated region
      $region13: #{encoder_forward.9} parent=11 // pred_check
        %p145 = pneg %p57
      $region14: #{encoder_forward.9} parent=11 // pred_check_branch
        %147 = sbr.rel (%p145) target = $region16
      $region15: #{encoder_forward.9} parent=11 // pred_region
        _
      $region16: #{encoder_forward.9} parent=11 // pred_fallthru
        _
      // Predicated region
      $region17: #{encoder_forward.9} parent=11 // pred_check
        %p148 = pneg %p78
      $region18: #{encoder_forward.9} parent=11 // pred_check_branch
        %150 = sbr.rel (%p148) target = $region20
      $region19: #{encoder_forward.9} parent=11 // pred_region
        _
      $region20: #{encoder_forward.9} parent=11 // pred_fallthru
        _
    $region12: #{encoder_forward.9} parent=5 // pred_fallthru
      _
    %p151 = scmp.lt.s32.totalorder %s10, 2
    // Predicated region
    $region21: #{encoder_forward.9} parent=5 // pred_check
      %p152 = pneg %p151
    $region22: #{encoder_forward.9} parent=5 // pred_check_branch
      %154 = sbr.rel (%p152) target = $region24
    $region23: #{encoder_forward.9} parent=5 // pred_region
      // Predicated region
      $region25: #{encoder_forward.9} parent=23 // pred_check
        %p155 = pneg %p30
      $region26: #{encoder_forward.9} parent=23 // pred_check_branch
        %157 = sbr.rel (%p155) target = $region28
      $region27: #{encoder_forward.9} parent=23 // pred_region
        %p158 = scmp.lt.s32.totalorder %s10, 1
        %s159 = scalar_select %p158, %s10, 1
        %s160 = smul.addr %s159, 8
        %s161 = scalar_lea.vmem %s0, %s160
      $region28: #{encoder_forward.9} parent=23 // pred_fallthru
        _
      // Predicated region
      $region29: #{encoder_forward.9} parent=23 // pred_check
        %p162 = pneg %p98
      $region30: #{encoder_forward.9} parent=23 // pred_check_branch
        %164 = sbr.rel (%p162) target = $region32
      $region31: #{encoder_forward.9} parent=23 // pred_region
        %p165 = scmp.lt.s32.totalorder %s10, 1
        %s166 = scalar_select %p165, %s10, 1
        %s167 = scalar_lea.vmem %s3, %s166
      $region32: #{encoder_forward.9} parent=23 // pred_fallthru
        _
    $region24: #{encoder_forward.9} parent=5 // pred_fallthru
      _
    %p168 = scmp.le.s32.totalorder 1, %s10
    %p169 = scmp.lt.s32.totalorder %s10, 3
    %p170 = pnand %p168, %p169
    %p171 = pneg %p170
    // Predicated region
    $region33: #{encoder_forward.9} parent=5 // pred_check
      _
    $region34: #{encoder_forward.9} parent=5 // pred_check_branch
      %173 = sbr.rel (%p170) target = $region36
    $region35: #{encoder_forward.9} parent=5 // pred_region
      %s174 = ssub.s32 %s10, 1
      %p175 = scmp.lt.s32.totalorder %s15, 1
      %s176 = scalar_select %p175, %s15, 1
      %s177 = smul.addr %s176, 8
      %s178 = scalar_lea.vmem %s0, %s177
      %p179 = pneg %p36
      %p180 = pneg %p33
      %p181 = pneg %p57
      %p182 = pneg %p54
      %p183 = pneg %p78
      %p184 = pneg %p75
      %p185 = scmp.lt.s32.totalorder %s15, 1
      %s186 = scalar_select %p185, %s15, 1
      %s187 = scalar_lea.vmem %s3, %s186
      %p188 = pneg %p104
      %p189 = pneg %p101
      %p190 = pneg %p130
      %p191 = pneg %p127
      %p192 = scmp.lt.s32.totalorder %s15, 1
      %s193 = scalar_select %p192, %s15, 1
      %s194 = smul.addr %s193, 8
      %s195 = scalar_lea.vmem %s4, %s194
      %p196 = scmp.lt.s32.totalorder %s15, 1
      %s197 = scalar_select %p196, %s15, 1
      %s198 = smul.addr %s197, 8
      %s199 = scalar_lea.vmem %s0, %s198
      %p200 = scmp.lt.s32.totalorder %s15, 1
      %s201 = scalar_select %p200, %s15, 1
      %s202 = scalar_lea.vmem %s3, %s201
      %p203 = scmp.lt.s32.totalorder %s15, 1
      %s204 = scalar_select %p203, %s15, 1
      %s205 = smul.addr %s204, 8
      %s206 = scalar_lea.vmem %s4, %s205
      %v207 = vld [vmem:[%s202] sm:$0x1]
      %vm208 = vcmp.gt.f32.partialorder %v207, 0.5
      %v209 = vld [vmem:[%s199] sm:$0xff]
      %v210 = vld [vmem:[%s1] sm:$0xff]
      %v211 = vld [vmem:[%s1 + $0x8] sm:$0x7f]
      %v212 = vld [vmem:[%s2] sm:$0xff]
      %v213 = vld [vmem:[%s2 + $0x8] sm:$0x7f]
      %v214 = vmul.f32 %v209, 0.14433756
      %vm215 = vcmask 130048
      %v217 = vsel %vm215, %v214, 0
      %v220 = vsel %vm215, %v212, 0
      %v223 = vsel %vm215, %v213, 0
      %225 = vmatpush.xpose.msra.mxu0 0.0
      %226 = vmatpush.xpose.msra.mxu0 0.0
      %227 = vmatpush.xpose.msra.mxu0 0.0
      %228 = vmatpush.xpose.msra.mxu0 0.0
      %229 = vmatpush.xpose.msra.mxu0 0.0
      %230 = vmatpush.xpose.msra.mxu0 0.0
      %231 = vmatpush.xpose.msra.mxu0 0.0
      %232 = vmatpush.xpose.msra.mxu0 0.0
      %233 = vmatpush.xpose.msra.mxu0 0.0
      %234 = vmatpush.xpose.msra.mxu0 0.0
      %235 = vmatpush.xpose.msra.mxu0 0.0
      %236 = vmatpush.xpose.msra.mxu0 0.0
      %237 = vmatpush.xpose.msra.mxu0 0.0
      %238 = vmatpush.xpose.msra.mxu0 0.0
      %239 = vmatpush.xpose.msra.mxu0 %v223
      %240 = vmatpush.xpose.msra.mxu0 %v220
      %241 = vmatmul.f32.gmra.mxu0 %v217
      %v242 = vpop.f32.mrf.mxu0
      %v243 = vadd.f32 0.0, %v242
      %244 = vdwg.mxu0
      %246 = vrot.lane.b32.xlu0 %v209, 96
      %v247 = vpop.permute.xlu0 %246
      %v248 = vsel %vm215, %v247, 0
      %v251 = vsel %vm215, %v210, 0
      %v254 = vsel %vm215, %v211, 0
      %256 = vmatpush.xpose.msra.mxu0 0.0
      %257 = vmatpush.xpose.msra.mxu0 0.0
      %258 = vmatpush.xpose.msra.mxu0 0.0
      %259 = vmatpush.xpose.msra.mxu0 0.0
      %260 = vmatpush.xpose.msra.mxu0 0.0
      %261 = vmatpush.xpose.msra.mxu0 0.0
      %262 = vmatpush.xpose.msra.mxu0 0.0
      %263 = vmatpush.xpose.msra.mxu0 0.0
      %264 = vmatpush.xpose.msra.mxu0 0.0
      %265 = vmatpush.xpose.msra.mxu0 0.0
      %266 = vmatpush.xpose.msra.mxu0 0.0
      %267 = vmatpush.xpose.msra.mxu0 0.0
      %268 = vmatpush.xpose.msra.mxu0 0.0
      %269 = vmatpush.xpose.msra.mxu0 0.0
      %270 = vmatpush.xpose.msra.mxu0 %v254
      %271 = vmatpush.xpose.msra.mxu0 %v251
      %272 = vmatmul.f32.gmra.mxu0 %v248
      %v273 = vpop.f32.mrf.mxu0
      %v274 = vadd.f32 0.0, %v273
      %275 = vdwg.mxu0
      %277 = vrot.lane.b32.xlu0 %v243, 1
      %v278 = vpop.permute.xlu0 %277
      %280 = vrot.lane.b32.xlu0 %v243, 2
      %v281 = vpop.permute.xlu0 %280
      %283 = vrot.lane.b32.xlu0 %v243, 3
      %v284 = vpop.permute.xlu0 %283
      %286 = vrot.lane.b32.xlu0 %v243, 4
      %v287 = vpop.permute.xlu0 %286
      %289 = vrot.lane.b32.xlu0 %v243, 5
      %v290 = vpop.permute.xlu0 %289
      %292 = vrot.lane.b32.xlu0 %v243, 6
      %v293 = vpop.permute.xlu0 %292
      %295 = vrot.lane.b32.xlu0 %v243, 7
      %v296 = vpop.permute.xlu0 %295
      %vm298 = vcmask 1040384
      %v299 = vsel %vm298, %v243, %v278
      %vm300 = vcmask 1041408
      %v301 = vsel %vm300, %v299, %v281
      %vm302 = vcmask 1042432
      %v303 = vsel %vm302, %v301, %v284
      %vm304 = vcmask 1043456
      %v305 = vsel %vm304, %v303, %v287
      %vm306 = vcmask 1044480
      %v307 = vsel %vm306, %v305, %v290
      %vm308 = vcmask 1045504
      %v309 = vsel %vm308, %v307, %v293
      %vm310 = vcmask 1046528
      %v311 = vsel %vm310, %v309, %v296
      %313 = vrot.lane.b32.xlu0 %v311, 121
      %v314 = vpop.permute.xlu0 %313
      %316 = vmatpush.xpose.msra.mxu0 0.0
      %317 = vmatpush.xpose.msra.mxu0 0.0
      %318 = vmatpush.xpose.msra.mxu0 0.0
      %319 = vmatpush.xpose.msra.mxu0 0.0
      %320 = vmatpush.xpose.msra.mxu0 0.0
      %321 = vmatpush.xpose.msra.mxu0 0.0
      %322 = vmatpush.xpose.msra.mxu0 0.0
      %323 = vmatpush.xpose.msra.mxu0 0.0
      %324 = vmatpush.xpose.msra.mxu0 0.0
      %325 = vmatpush.xpose.msra.mxu0 0.0
      %326 = vmatpush.xpose.msra.mxu0 0.0
      %327 = vmatpush.xpose.msra.mxu0 0.0
      %328 = vmatpush.xpose.msra.mxu0 0.0
      %329 = vmatpush.xpose.msra.mxu0 0.0
      %330 = vmatpush.xpose.msra.mxu0 0.0
      %331 = vmatpush.xpose.msra.mxu0 %v248
      %332 = vmatmul.f32.gmra.mxu0 %v217
      %v333 = vpop.f32.mrf.mxu0
      %v334 = vadd.f32 %v314, %v333
      %335 = vdwg.mxu0
      %337 = vrot.lane.b32.xlu0 %v274, 1
      %v338 = vpop.permute.xlu0 %337
      %340 = vrot.lane.b32.xlu0 %v274, 2
      %v341 = vpop.permute.xlu0 %340
      %343 = vrot.lane.b32.xlu0 %v274, 3
      %v344 = vpop.permute.xlu0 %343
      %346 = vrot.lane.b32.xlu0 %v274, 4
      %v347 = vpop.permute.xlu0 %346
      %349 = vrot.lane.b32.xlu0 %v274, 5
      %v350 = vpop.permute.xlu0 %349
      %352 = vrot.lane.b32.xlu0 %v274, 6
      %v353 = vpop.permute.xlu0 %352
      %355 = vrot.lane.b32.xlu0 %v274, 7
      %v356 = vpop.permute.xlu0 %355
      %v358 = vsel %vm298, %v274, %v338
      %v359 = vsel %vm300, %v358, %v341
      %v360 = vsel %vm302, %v359, %v344
      %v361 = vsel %vm304, %v360, %v347
      %v362 = vsel %vm306, %v361, %v350
      %v363 = vsel %vm308, %v362, %v353
      %v364 = vsel %vm310, %v363, %v356
      %366 = vrot.lane.b32.xlu0 %v364, 121
      %v367 = vpop.permute.xlu0 %366
      %369 = vxpose.xlu0.b32.start [1/16] %v367, 128
      %370 = vxpose.xlu0.b32.cont [2/16] 0.0, 128
      %371 = vxpose.xlu0.b32.cont [3/16] 0.0, 128
      %372 = vxpose.xlu0.b32.cont [4/16] 0.0, 128
      %373 = vxpose.xlu0.b32.cont [5/16] 0.0, 128
      %374 = vxpose.xlu0.b32.cont [6/16] 0.0, 128
      %375 = vxpose.xlu0.b32.cont [7/16] 0.0, 128
      %376 = vxpose.xlu0.b32.cont [8/16] 0.0, 128
      %377 = vxpose.xlu0.b32.cont [9/16] 0.0, 128
      %378 = vxpose.xlu0.b32.cont [10/16] 0.0, 128
      %379 = vxpose.xlu0.b32.cont [11/16] 0.0, 128
      %380 = vxpose.xlu0.b32.cont [12/16] 0.0, 128
      %381 = vxpose.xlu0.b32.cont [13/16] 0.0, 128
      %382 = vxpose.xlu0.b32.cont [14/16] 0.0, 128
      %383 = vxpose.xlu0.b32.cont [15/16] 0.0, 128
      %384 = vxpose.xlu0.b32.end [16/16] 0.0, 128
      %v385 = vpop.trf.xlu0
      %v386 = vpop.trf.xlu0
      %v387 = vpop.trf.xlu0
      %v388 = vpop.trf.xlu0
      %v389 = vpop.trf.xlu0
      %v390 = vpop.trf.xlu0
      %v391 = vpop.trf.xlu0
      %v392 = vpop.trf.xlu0
      %v393 = vpop.trf.xlu0
      %v394 = vpop.trf.xlu0
      %v395 = vpop.trf.xlu0
      %v396 = vpop.trf.xlu0
      %v397 = vpop.trf.xlu0
      %v398 = vpop.trf.xlu0
      %v399 = vpop.trf.xlu0
      %v400 = vpop.trf.xlu0
      %v401 = vadd.f32 %v334, %v385
      %v402 = vsel %vm208, 1, 0
      %v403 = vperm.slane %v402, 0
      %vm404 = vcmp.eq.s32.totalorder %v403, 1
      %v405 = vsel %vm404, -1e+30, %v401
      %vm406 = vcmask 64512
      %v407 = vsel %vm406, %v405, -inf
      %408 = vmax.xlane.f32.xlu0 %v407
      %v409 = vpop.xlane.xlu0 %408
      %v410 = vsub.f32 %v405, %v409
      %v411 = vmul.f32 %v410, 1.442695
      %v412 = vpow.pop %v411
      %v413 = vsel %vm406, %v412, 0.0
      %414 = vadd.xlane.f32.xlu0 %v413
      %v415 = vpop.xlane.xlu0 %414
      %v416 = vrcp.pop %v415
      %v417 = vmul.f32 %v415, %v416
      %v418 = vsub.f32 1.0, %v417
      %v419 = vmul.f32 %v416, %v418
      %v420 = vadd.f32 %v416, %v419
      %vm421 = vweird.f32 %v415
      %vm422 = vweird.f32 %v416
      %vm423 = vmor %vm421, %vm422
      %v424 = vsel %vm423, %v416, %v420
      %v425 = vand.u32 2147483647, %v415
      %vm426 = vcmp.eq.f32.partialorder %v425, 8.507059e+37
      %v427 = vand.u32 %v415, 2147483648
      %v428 = vor.u32 1.1754944e-38, %v427
      %v429 = vsel %vm426, %v428, %v424
      %v430 = vmul.f32 %v412, %v429
      %v431 = vsel %vm404, 0.0, %v430
      %432 = vrot.lane.b32.xlu0 %v209, 64
      %v433 = vpop.permute.xlu0 %432
      %v436 = vsel %vm406, %v431, 0
      %438 = vmatpush.msra.mxu0 0.0
      %439 = vmatpush.msra.mxu0 0.0
      %440 = vmatpush.msra.mxu0 0.0
      %441 = vmatpush.msra.mxu0 0.0
      %442 = vmatpush.msra.mxu0 0.0
      %443 = vmatpush.msra.mxu0 0.0
      %444 = vmatpush.msra.mxu0 0.0
      %445 = vmatpush.msra.mxu0 0.0
      %446 = vmatpush.msra.mxu0 0.0
      %447 = vmatpush.msra.mxu0 0.0
      %448 = vmatpush.msra.mxu0 0.0
      %449 = vmatpush.msra.mxu0 0.0
      %450 = vmatpush.msra.mxu0 0.0
      %451 = vmatpush.msra.mxu0 0.0
      %452 = vmatpush.msra.mxu0 0.0
      %453 = vmatpush.msra.mxu0 %v433
      %454 = vmatmul.f32.gmra.mxu0 %v436
      %v455 = vpop.f32.mrf.mxu0
      %v456 = vadd.f32 0.0, %v455
      %457 = vdwg.mxu0
      %458 = vst.msk [vmem:[%s206] sm:$0xff] %vm215, %v456
      %459 = vrot.lane.b32.xlu0 %v214, 112
      %v460 = vpop.permute.xlu0 %459
      %461 = vrot.lane.b32.xlu0 %v212, 112
      %v462 = vpop.permute.xlu0 %461
      %463 = vrot.lane.b32.xlu0 %v213, 112
      %v464 = vpop.permute.xlu0 %463
      %v465 = vsel %vm215, %v460, 0
      %v467 = vsel %vm215, %v462, 0
      %v469 = vsel %vm215, %v464, 0
      %471 = vmatpush.xpose.msra.mxu0 0.0
      %472 = vmatpush.xpose.msra.mxu0 0.0
      %473 = vmatpush.xpose.msra.mxu0 0.0
      %474 = vmatpush.xpose.msra.mxu0 0.0
      %475 = vmatpush.xpose.msra.mxu0 0.0
      %476 = vmatpush.xpose.msra.mxu0 0.0
      %477 = vmatpush.xpose.msra.mxu0 0.0
      %478 = vmatpush.xpose.msra.mxu0 0.0
      %479 = vmatpush.xpose.msra.mxu0 0.0
      %480 = vmatpush.xpose.msra.mxu0 0.0
      %481 = vmatpush.xpose.msra.mxu0 0.0
      %482 = vmatpush.xpose.msra.mxu0 0.0
      %483 = vmatpush.xpose.msra.mxu0 0.0
      %484 = vmatpush.xpose.msra.mxu0 0.0
      %485 = vmatpush.xpose.msra.mxu0 %v469
      %486 = vmatpush.xpose.msra.mxu0 %v467
      %487 = vmatmul.f32.gmra.mxu0 %v465
      %v488 = vpop.f32.mrf.mxu0
      %v489 = vadd.f32 0.0, %v488
      %490 = vdwg.mxu0
      %491 = vrot.lane.b32.xlu0 %v209, 80
      %v492 = vpop.permute.xlu0 %491
      %493 = vrot.lane.b32.xlu0 %v210, 112
      %v494 = vpop.permute.xlu0 %493
      %495 = vrot.lane.b32.xlu0 %v211, 112
      %v496 = vpop.permute.xlu0 %495
      %v497 = vsel %vm215, %v492, 0
      %v499 = vsel %vm215, %v494, 0
      %v501 = vsel %vm215, %v496, 0
      %503 = vmatpush.xpose.msra.mxu0 0.0
      %504 = vmatpush.xpose.msra.mxu0 0.0
      %505 = vmatpush.xpose.msra.mxu0 0.0
      %506 = vmatpush.xpose.msra.mxu0 0.0
      %507 = vmatpush.xpose.msra.mxu0 0.0
      %508 = vmatpush.xpose.msra.mxu0 0.0
      %509 = vmatpush.xpose.msra.mxu0 0.0
      %510 = vmatpush.xpose.msra.mxu0 0.0
      %511 = vmatpush.xpose.msra.mxu0 0.0
      %512 = vmatpush.xpose.msra.mxu0 0.0
      %513 = vmatpush.xpose.msra.mxu0 0.0
      %514 = vmatpush.xpose.msra.mxu0 0.0
      %515 = vmatpush.xpose.msra.mxu0 0.0
      %516 = vmatpush.xpose.msra.mxu0 0.0
      %517 = vmatpush.xpose.msra.mxu0 %v501
      %518 = vmatpush.xpose.msra.mxu0 %v499
      %519 = vmatmul.f32.gmra.mxu0 %v497
      %v520 = vpop.f32.mrf.mxu0
      %v521 = vadd.f32 0.0, %v520
      %522 = vdwg.mxu0
      %524 = vrot.lane.b32.xlu0 %v489, 1
      %v525 = vpop.permute.xlu0 %524
      %527 = vrot.lane.b32.xlu0 %v489, 2
      %v528 = vpop.permute.xlu0 %527
      %530 = vrot.lane.b32.xlu0 %v489, 3
      %v531 = vpop.permute.xlu0 %530
      %533 = vrot.lane.b32.xlu0 %v489, 4
      %v534 = vpop.permute.xlu0 %533
      %536 = vrot.lane.b32.xlu0 %v489, 5
      %v537 = vpop.permute.xlu0 %536
      %539 = vrot.lane.b32.xlu0 %v489, 6
      %v540 = vpop.permute.xlu0 %539
      %542 = vrot.lane.b32.xlu0 %v489, 7
      %v543 = vpop.permute.xlu0 %542
      %v545 = vsel %vm298, %v489, %v525
      %v546 = vsel %vm300, %v545, %v528
      %v547 = vsel %vm302, %v546, %v531
      %v548 = vsel %vm304, %v547, %v534
      %v549 = vsel %vm306, %v548, %v537
      %v550 = vsel %vm308, %v549, %v540
      %v551 = vsel %vm310, %v550, %v543
      %553 = vrot.lane.b32.xlu0 %v551, 121
      %v554 = vpop.permute.xlu0 %553
      %556 = vmatpush.xpose.msra.mxu0 0.0
      %557 = vmatpush.xpose.msra.mxu0 0.0
      %558 = vmatpush.xpose.msra.mxu0 0.0
      %559 = vmatpush.xpose.msra.mxu0 0.0
      %560 = vmatpush.xpose.msra.mxu0 0.0
      %561 = vmatpush.xpose.msra.mxu0 0.0
      %562 = vmatpush.xpose.msra.mxu0 0.0
      %563 = vmatpush.xpose.msra.mxu0 0.0
      %564 = vmatpush.xpose.msra.mxu0 0.0
      %565 = vmatpush.xpose.msra.mxu0 0.0
      %566 = vmatpush.xpose.msra.mxu0 0.0
      %567 = vmatpush.xpose.msra.mxu0 0.0
      %568 = vmatpush.xpose.msra.mxu0 0.0
      %569 = vmatpush.xpose.msra.mxu0 0.0
      %570 = vmatpush.xpose.msra.mxu0 0.0
      %571 = vmatpush.xpose.msra.mxu0 %v497
      %572 = vmatmul.f32.gmra.mxu0 %v465
      %v573 = vpop.f32.mrf.mxu0
      %v574 = vadd.f32 %v554, %v573
      %575 = vdwg.mxu0
      %577 = vrot.lane.b32.xlu0 %v521, 1
      %v578 = vpop.permute.xlu0 %577
      %580 = vrot.lane.b32.xlu0 %v521, 2
      %v581 = vpop.permute.xlu0 %580
      %583 = vrot.lane.b32.xlu0 %v521, 3
      %v584 = vpop.permute.xlu0 %583
      %586 = vrot.lane.b32.xlu0 %v521, 4
      %v587 = vpop.permute.xlu0 %586
      %589 = vrot.lane.b32.xlu0 %v521, 5
      %v590 = vpop.permute.xlu0 %589
      %592 = vrot.lane.b32.xlu0 %v521, 6
      %v593 = vpop.permute.xlu0 %592
      %595 = vrot.lane.b32.xlu0 %v521, 7
      %v596 = vpop.permute.xlu0 %595
      %v598 = vsel %vm298, %v521, %v578
      %v599 = vsel %vm300, %v598, %v581
      %v600 = vsel %vm302, %v599, %v584
      %v601 = vsel %vm304, %v600, %v587
      %v602 = vsel %vm306, %v601, %v590
      %v603 = vsel %vm308, %v602, %v593
      %v604 = vsel %vm310, %v603, %v596
      %606 = vrot.lane.b32.xlu0 %v604, 121
      %v607 = vpop.permute.xlu0 %606
      %609 = vxpose.xlu0.b32.start [1/16] %v607, 128
      %610 = vxpose.xlu0.b32.cont [2/16] 0.0, 128
      %611 = vxpose.xlu0.b32.cont [3/16] 0.0, 128
      %612 = vxpose.xlu0.b32.cont [4/16] 0.0, 128
      %613 = vxpose.xlu0.b32.cont [5/16] 0.0, 128
      %614 = vxpose.xlu0.b32.cont [6/16] 0.0, 128
      %615 = vxpose.xlu0.b32.cont [7/16] 0.0, 128
      %616 = vxpose.xlu0.b32.cont [8/16] 0.0, 128
      %617 = vxpose.xlu0.b32.cont [9/16] 0.0, 128
      %618 = vxpose.xlu0.b32.cont [10/16] 0.0, 128
      %619 = vxpose.xlu0.b32.cont [11/16] 0.0, 128
      %620 = vxpose.xlu0.b32.cont [12/16] 0.0, 128
      %621 = vxpose.xlu0.b32.cont [13/16] 0.0, 128
      %622 = vxpose.xlu0.b32.cont [14/16] 0.0, 128
      %623 = vxpose.xlu0.b32.cont [15/16] 0.0, 128
      %624 = vxpose.xlu0.b32.end [16/16] 0.0, 128
      %v625 = vpop.trf.xlu0
      %v626 = vpop.trf.xlu0
      %v627 = vpop.trf.xlu0
      %v628 = vpop.trf.xlu0
      %v629 = vpop.trf.xlu0
      %v630 = vpop.trf.xlu0
      %v631 = vpop.trf.xlu0
      %v632 = vpop.trf.xlu0
      %v633 = vpop.trf.xlu0
      %v634 = vpop.trf.xlu0
      %v635 = vpop.trf.xlu0
      %v636 = vpop.trf.xlu0
      %v637 = vpop.trf.xlu0
      %v638 = vpop.trf.xlu0
      %v639 = vpop.trf.xlu0
      %v640 = vpop.trf.xlu0
      %v641 = vadd.f32 %v574, %v625
      %v642 = vsel %vm404, -1e+30, %v641
      %v643 = vsel %vm406, %v642, -inf
      %644 = vmax.xlane.f32.xlu0 %v643
      %v645 = vpop.xlane.xlu0 %644
      %v646 = vsub.f32 %v642, %v645
      %v647 = vmul.f32 %v646, 1.442695
      %v648 = vpow.pop %v647
      %v649 = vsel %vm406, %v648, 0.0
      %650 = vadd.xlane.f32.xlu0 %v649
      %v651 = vpop.xlane.xlu0 %650
      %v652 = vrcp.pop %v651
      %v653 = vmul.f32 %v651, %v652
      %v654 = vsub.f32 1.0, %v653
      %v655 = vmul.f32 %v652, %v654
      %v656 = vadd.f32 %v652, %v655
      %vm657 = vweird.f32 %v651
      %vm658 = vweird.f32 %v652
      %vm659 = vmor %vm657, %vm658
      %v660 = vsel %vm659, %v652, %v656
      %v661 = vand.u32 2147483647, %v651
      %vm662 = vcmp.eq.f32.partialorder %v661, 8.507059e+37
      %v663 = vand.u32 %v651, 2147483648
      %v664 = vor.u32 1.1754944e-38, %v663
      %v665 = vsel %vm662, %v664, %v660
      %v666 = vmul.f32 %v648, %v665
      %v667 = vsel %vm404, 0.0, %v666
      %668 = vrot.lane.b32.xlu0 %v209, 48
      %v669 = vpop.permute.xlu0 %668
      %v672 = vsel %vm406, %v667, 0
      %674 = vmatpush.msra.mxu0 0.0
      %675 = vmatpush.msra.mxu0 0.0
      %676 = vmatpush.msra.mxu0 0.0
      %677 = vmatpush.msra.mxu0 0.0
      %678 = vmatpush.msra.mxu0 0.0
      %679 = vmatpush.msra.mxu0 0.0
      %680 = vmatpush.msra.mxu0 0.0
      %681 = vmatpush.msra.mxu0 0.0
      %682 = vmatpush.msra.mxu0 0.0
      %683 = vmatpush.msra.mxu0 0.0
      %684 = vmatpush.msra.mxu0 0.0
      %685 = vmatpush.msra.mxu0 0.0
      %686 = vmatpush.msra.mxu0 0.0
      %687 = vmatpush.msra.mxu0 0.0
      %688 = vmatpush.msra.mxu0 0.0
      %689 = vmatpush.msra.mxu0 %v669
      %690 = vmatmul.f32.gmra.mxu0 %v672
      %v691 = vpop.f32.mrf.mxu0
      %v692 = vadd.f32 0.0, %v691
      %693 = vdwg.mxu0
      %695 = vrot.lane.b32.xlu0 %v692, 16
      %v696 = vpop.permute.xlu0 %695
      %vm698 = vcmask 261248
      %699 = vst.msk [vmem:[%s206] sm:$0xff] %vm698, %v696
      %p700 = scmp.lt.s32.totalorder %s15, 1
      %s701 = scalar_select %p700, %s15, 1
      %s702 = smul.addr %s701, 8
      %s703 = scalar_lea.vmem %s4, %s702
      // Predicated region
      $region37: #{encoder_forward.9} parent=35 // pred_check
        %p704 = pneg %p127
      $region38: #{encoder_forward.9} parent=35 // pred_check_branch
        %706 = sbr.rel (%p704) target = $region40
      $region39: #{encoder_forward.9} parent=35 // pred_region
        _
      $region40: #{encoder_forward.9} parent=35 // pred_fallthru
        _
    $region36: #{encoder_forward.9} parent=5 // pred_fallthru
      _
    %p707 = scmp.le.s32.totalorder 2, %s10
    // Predicated region
    $region41: #{encoder_forward.9} parent=5 // pred_check
      %p708 = pneg %p707
    $region42: #{encoder_forward.9} parent=5 // pred_check_branch
      %710 = sbr.rel (%p708) target = $region44
    $region43: #{encoder_forward.9} parent=5 // pred_region
      %s711 = ssub.s32 %s10, 2
      // Predicated region
      $region45: #{encoder_forward.9} parent=43 // pred_check
        %p712 = pneg %p133
      $region46: #{encoder_forward.9} parent=43 // pred_check_branch
        %714 = sbr.rel (%p712) target = $region48
      $region47: #{encoder_forward.9} parent=43 // pred_region
        %p715 = scmp.lt.s32.totalorder %s16, 1
        %s716 = scalar_select %p715, %s16, 1
        %s717 = smul.addr %s716, 8
        %s718 = scalar_lea.vmem %s4, %s717
      $region48: #{encoder_forward.9} parent=43 // pred_fallthru
        _
    $region44: #{encoder_forward.9} parent=5 // pred_fallthru
      _
  $region6: #{encoder_forward.9} parent=0 // loop_footer
    %s14 = sadd.s32 1, %s10
  $region7: #{encoder_forward.9} parent=0 // loop_footer_branch
    %9 = sbr.rel target = $region3
  $region8: #{encoder_forward.9} parent=0 // loop_exit
    _

</llo_original>
